<compile_context>
chip_gen: v5e
topology: v5e:2x2
jax: 0.10.0
libtpu: 0.0.40
codegen_flags: <defaults>
</compile_context>

<pallas_src>
import jax
import jax.numpy as jnp
from jax.experimental import pallas as pl
from jax.experimental.pallas import tpu as pltpu

VOCAB = 32
EMB = 16        # encoder.emb_size
HID = 16        # encoder.hidden_size
CNN = 8         # cnn_size
DNN = 8         # dnn_size (layer exists in __init__ but is unused in forward)
B = 2
T = 8

OUT_LANES = 128     # lane-dense output slab; wrapper slices [:, :3]


def _align8(x):
    return ((x + 7) // 8) * 8


# per-step row block in the time-interleaved gi / mask layout (sublane aligned)
STEP_ROWS = _align8(2 * B)
NROW = T * STEP_ROWS

# row offsets inside the packed f32 weight slab (all blocks start 8-aligned)
ROW_TAB = 0                                   # (2*VOCAB, 3H) fused emb@W_ih^T + bias
ROW_WRZN = _align8(ROW_TAB + 2 * VOCAB)       # (2H, 3H) block-stacked hidden weights
ROW_BHN = _align8(ROW_WRZN + 2 * HID)         # (2B, H)  per-direction b_hn
ROW_WCNN = _align8(ROW_BHN + 2 * B)           # (2H, CNN)
ROW_BCNN = _align8(ROW_WCNN + 2 * HID)        # (1, CNN)
ROW_WLIN = _align8(ROW_BCNN + 1)              # (CNN, OUT_LANES)
ROW_BLIN = _align8(ROW_WLIN + CNN)            # (1, OUT_LANES)
SLAB_ROWS = _align8(ROW_BLIN + 1)
SLAB_LANES = 128


# ---------------------------------------------------------------------------
# Fused kernel: (embedding+input-proj) dot -> bi-GRU recurrence -> head.
# ---------------------------------------------------------------------------
def _fused_kernel(int_ref, slab_ref, out_ref, seq_ref):
    f32 = jnp.float32
    H, H2, H3 = HID, 2 * HID, 3 * HID

    ids = int_ref[:, 0:1]                       # (NROW, 1) i32, interleaved fwd/rev
    mask = int_ref[:, 1:2].astype(f32)          # (NROW, 1) packed-seq validity mask

    # ---- ONE pre-loop dot: one-hot ids x fused (emb @ W_ih^T + bias) table -
    # forward rows hit table rows [0, VOCAB), reverse rows are offset by VOCAB.
    vocab_iota = jax.lax.broadcasted_iota(jnp.int32, (NROW, 2 * VOCAB), 1)
    onehot = (vocab_iota == ids).astype(f32)                            # (NROW, 2V)
    gi_all = jnp.dot(onehot, slab_ref[ROW_TAB:ROW_TAB + 2 * VOCAB, 0:H3],
                     preferred_element_type=f32)                        # (NROW, 3H)

    w_rzn = slab_ref[ROW_WRZN:ROW_WRZN + H2, 0:H3]                      # (2H, 3H)
    bhn = slab_ref[ROW_BHN:ROW_BHN + 2 * B, 0:H]                        # (2B, H)

    # block-diagonal direction mask for the wide stacked hidden state:
    #   rows 0..B-1  (forward)  live columns [:H]
    #   rows B..2B-1 (reverse)  live columns [H:]
    row_i = jax.lax.broadcasted_iota(jnp.int32, (2 * B, H2), 0)
    col_i = jax.lax.broadcasted_iota(jnp.int32, (2 * B, H2), 1)
    dmask = ((row_i < B) == (col_i < H)).astype(f32)                    # (2B, 2H)

    h = jnp.zeros((2 * B, H), f32)              # compact stacked state (fwd | rev rows)
    for s in range(T):                          # fully unrolled, T static
        r0 = s * STEP_ROWS
        gi = gi_all[r0:r0 + 2 * B]              # (2B, 3H) static aligned slice
        m = mask[r0:r0 + 2 * B]                 # (2B, 1)

        # one dot per step for BOTH directions and all three gates
        h_wide = jnp.concatenate([h, h], axis=1) * dmask                # (2B, 2H)
        gh = jnp.dot(h_wide, w_rzn, preferred_element_type=f32)         # (2B, 3H)

        rz = jax.nn.sigmoid(gi[:, :H2] + gh[:, :H2])                    # one EUP pass r|z
        r = rz[:, :H]
        z = rz[:, H:]
        n = jnp.tanh(gi[:, H2:] + r * (gh[:, H2:] + bhn))
        h_new = (1.0 - z) * n + z * h

        # packed-sequence masking (pad_packed_sequence semantics)
        h = m * h_new + (1.0 - m) * h
        out_s = m * h                           # zero at padded steps

        tr = T - 1 - s
        seq_ref[s * B:(s + 1) * B, 0:H] = out_s[:B]        # forward output @ time s
        seq_ref[tr * B:(tr + 1) * B, H:H2] = out_s[B:]     # reverse output @ time tr

    # ---- head: Conv2d(1, C, (2H, 1)) == per-row matmul, ReLU, Linear(C, 3) --
    seq = seq_ref[...]                                                   # (T*B, 2H)
    w_cnn = slab_ref[ROW_WCNN:ROW_WCNN + H2, 0:CNN]
    b_cnn = slab_ref[ROW_BCNN:ROW_BCNN + 1, 0:CNN]
    w_lin = slab_ref[ROW_WLIN:ROW_WLIN + CNN, 0:OUT_LANES]               # padded to 128
    b_lin = slab_ref[ROW_BLIN:ROW_BLIN + 1, 0:OUT_LANES]
    hc = jnp.maximum(jnp.dot(seq, w_cnn, preferred_element_type=f32) + b_cnn, 0.0)
    out_ref[...] = jnp.dot(hc, w_lin, preferred_element_type=f32) + b_lin


# ---------------------------------------------------------------------------
# Host-side (one-time) weight re-layout: everything packed into ONE f32 slab.
# ---------------------------------------------------------------------------
def prepare_params(params):
    H = HID
    f32 = jnp.float32
    E = params['embedding'].astype(f32)                          # (VOCAB, EMB)

    def fused_table(w_ih, b_ih, b_hh):
        # r/z gates carry b_ih + b_hh merged; n gate only b_ih (b_hn stays inside r*(..)).
        wiT = w_ih.T.astype(f32)                                 # (EMB, 3H)
        bias = jnp.concatenate([b_ih[:2 * H] + b_hh[:2 * H], b_ih[2 * H:]]).astype(f32)
        return E @ wiT + bias[None, :]                           # (VOCAB, 3H)

    tab = jnp.concatenate(
        [fused_table(params['w_ih_f'], params['b_ih_f'], params['b_hh_f']),
         fused_table(params['w_ih_r'], params['b_ih_r'], params['b_hh_r'])],
        axis=0)                                                  # (2*VOCAB, 3H)

    # block-stacked hidden weights: forward state rows hit the top H rows,
    # reverse state rows hit the bottom H rows (all three gates in one matrix).
    w_rzn = jnp.concatenate([params['w_hh_f'].T, params['w_hh_r'].T], axis=0).astype(f32)

    bhn = jnp.concatenate(
        [jnp.tile(params['b_hh_f'][None, 2 * H:], (B, 1)),
         jnp.tile(params['b_hh_r'][None, 2 * H:], (B, 1))], axis=0).astype(f32)  # (2B, H)

    w_cnn = params['cnn_w'].reshape(CNN, 2 * H).T.astype(f32)    # (2H, CNN)
    b_cnn = params['cnn_b'].astype(f32)[None, :]                 # (1, CNN)
    w_lin = jnp.zeros((CNN, OUT_LANES), f32).at[:, :3].set(params['lin_w'].T.astype(f32))
    b_lin = jnp.zeros((1, OUT_LANES), f32).at[:, :3].set(params['lin_b'].astype(f32)[None, :])

    slab = jnp.zeros((SLAB_ROWS, SLAB_LANES), f32)
    slab = slab.at[ROW_TAB:ROW_TAB + 2 * VOCAB, :3 * H].set(tab)
    slab = slab.at[ROW_WRZN:ROW_WRZN + 2 * H, :3 * H].set(w_rzn)
    slab = slab.at[ROW_BHN:ROW_BHN + 2 * B, :H].set(bhn)
    slab = slab.at[ROW_WCNN:ROW_WCNN + 2 * H, :CNN].set(w_cnn)
    slab = slab.at[ROW_BCNN:ROW_BCNN + 1, :CNN].set(b_cnn)
    slab = slab.at[ROW_WLIN:ROW_WLIN + CNN, :].set(w_lin)
    slab = slab.at[ROW_BLIN:ROW_BLIN + 1, :].set(b_lin)
    return slab


# ---------------------------------------------------------------------------
# Forward wrapper: one pallas_call, 2 packed inputs, trivial glue each side.
# ---------------------------------------------------------------------------
@jax.jit
def interstitial_forward(weight_slab, x_ids, lengths):
    pad = STEP_ROWS - 2 * B
    x_i = x_ids.astype(jnp.int32)
    fwd_ids = x_i.T                                  # (T, B): forward token @ time s
    rev_ids = x_i[:, ::-1].T + VOCAB                 # (T, B): reverse token @ time T-1-s
    ids_blk = jnp.concatenate([fwd_ids, rev_ids], axis=1)                 # (T, 2B)
    ids_blk = jnp.pad(ids_blk, ((0, 0), (0, pad)), constant_values=-1)    # pad rows -> zero one-hot

    l32 = lengths.astype(jnp.int32)[None, :]         # (1, B)
    t_idx = jnp.arange(T, dtype=jnp.int32)[:, None]  # (T, 1)
    m_blk = jnp.concatenate([(l32 > t_idx), (l32 > (T - 1 - t_idx))], axis=1)
    m_blk = jnp.pad(m_blk.astype(jnp.int32), ((0, 0), (0, pad)))

    int_slab = jnp.concatenate([ids_blk.reshape(NROW, 1),
                                m_blk.reshape(NROW, 1)], axis=1)          # (NROW, 2) i32

    vspec = pl.BlockSpec(memory_space=pltpu.MemorySpace.VMEM)
    y = pl.pallas_call(
        _fused_kernel,
        out_shape=jax.ShapeDtypeStruct((T * B, OUT_LANES), jnp.float32),
        in_specs=[vspec, vspec],
        out_specs=vspec,
        scratch_shapes=[pltpu.VMEM((T * B, 2 * HID), jnp.float32)],
    )(int_slab, weight_slab)

    # rows are time-major (t*B + b); model output layout is (B, 3, T)
    return jnp.transpose(y[:, :3].reshape(T, B, 3), (1, 2, 0))


# ---------------------------------------------------------------------------
# Deterministic parameter init (shapes match the PyTorch module's __init__)
# ---------------------------------------------------------------------------
def init_params(key):
    ks = jax.random.split(key, 15)

    def u(k, shape, scale=0.1):
        return jax.random.uniform(k, shape, jnp.float32, -scale, scale)

    p = {}
    p['embedding'] = u(ks[0], (VOCAB, EMB), 1.0)
    p['w_ih_f'] = u(ks[1], (3 * HID, EMB))
    p['w_hh_f'] = u(ks[2], (3 * HID, HID))
    p['b_ih_f'] = u(ks[3], (3 * HID,))
    p['b_hh_f'] = u(ks[4], (3 * HID,))
    p['w_ih_r'] = u(ks[5], (3 * HID, EMB))
    p['w_hh_r'] = u(ks[6], (3 * HID, HID))
    p['b_ih_r'] = u(ks[7], (3 * HID,))
    p['b_hh_r'] = u(ks[8], (3 * HID,))
    p['cnn_w'] = u(ks[9], (CNN, 1, 2 * HID, 1))   # Conv2d(1, C, (2H, 1)) weight
    p['cnn_b'] = u(ks[10], (CNN,))
    p['dnn_w'] = u(ks[11], (DNN, CNN))            # unused in forward
    p['dnn_b'] = u(ks[12], (DNN,))
    p['lin_w'] = u(ks[13], (3, CNN))
    p['lin_b'] = u(ks[14], (3,))
    return p


# ---------------------------------------------------------------------------
# Pure-JAX reference (same semantics) for a correctness check
# ---------------------------------------------------------------------------
def reference_forward(params, x_ids, lengths):
    H = HID
    emb = params['embedding'][x_ids].astype(jnp.float32)          # (B, T, E)

    def cell(x, h, wi, wh, bi, bh):
        gi = x @ wi.T + bi
        gh = h @ wh.T + bh
        r = jax.nn.sigmoid(gi[:, :H] + gh[:, :H])
        z = jax.nn.sigmoid(gi[:, H:2 * H] + gh[:, H:2 * H])
        n = jnp.tanh(gi[:, 2 * H:] + r * gh[:, 2 * H:])
        return (1 - z) * n + z * h

    mask = (jnp.arange(T)[None, :] < lengths[:, None]).astype(jnp.float32)
    hf = jnp.zeros((B, H), jnp.float32)
    hr = jnp.zeros((B, H), jnp.float32)
    out_f, out_r = [], [None] * T
    for t in range(T):
        m = mask[:, t:t + 1]
        hn = cell(emb[:, t], hf, params['w_ih_f'], params['w_hh_f'],
                  params['b_ih_f'], params['b_hh_f'])
        hf = m * hn + (1 - m) * hf
        out_f.append(m * hf)
    for t in range(T - 1, -1, -1):
        m = mask[:, t:t + 1]
        hn = cell(emb[:, t], hr, params['w_ih_r'], params['w_hh_r'],
                  params['b_ih_r'], params['b_hh_r'])
        hr = m * hn + (1 - m) * hr
        out_r[t] = m * hr
    seq = jnp.concatenate([jnp.stack(out_f, 1), jnp.stack(out_r, 1)], -1)
    w_cnn = params['cnn_w'].reshape(CNN, 2 * H)
    h = jnp.maximum(seq @ w_cnn.T + params['cnn_b'], 0.0)
    y = h @ params['lin_w'].T + params['lin_b']
    return jnp.transpose(y, (0, 2, 1))                            # (B, 3, T)


if __name__ == "__main__":
    key = jax.random.PRNGKey(0)
    kp, kx = jax.random.split(key)
    params = init_params(kp)
    weight_slab = prepare_params(params)

    x_ids = jax.random.randint(kx, (B, T), 0, VOCAB, dtype=jnp.int32)
    lengths = jnp.array([T, 5], dtype=jnp.int32)   # sorted descending, max == T

    out = interstitial_forward(weight_slab, x_ids, lengths)
    out = jax.block_until_ready(out)

    ref = reference_forward(params, x_ids, lengths)
    assert out.shape == (B, 3, T), out.shape
    assert jnp.allclose(out, ref, atol=1e-4, rtol=1e-4), \
        f"max err {jnp.max(jnp.abs(out - ref))}"

    print("KERNEL_OK")
</pallas_src>

<mosaic_0001>
module attributes {stable_mosaic.version = 11 : i64} {
  func.func @_fused_kernel(%arg0: memref<64x2xi32, #tpu.memory_space<vmem>>, %arg1: memref<160x128xf32, #tpu.memory_space<vmem>>, %arg2: memref<16x128xf32, #tpu.memory_space<vmem>>, %arg3: memref<16x32xf32, #tpu.memory_space<vmem>>) attributes {dimension_semantics = [], scalar_prefetch = 0 : i64, scratch_operands = 1 : i64, tpu.core_type = #tpu.core_type<tc>} {
    %c0 = arith.constant 0 : index
    %c0_0 = arith.constant 0 : index
    %0 = vector.load %arg0[%c0, %c0_0] : memref<64x2xi32, #tpu.memory_space<vmem>>, vector<64x1xi32>
    %c0_1 = arith.constant 0 : index
    %c1 = arith.constant 1 : index
    %1 = vector.load %arg0[%c0_1, %c1] : memref<64x2xi32, #tpu.memory_space<vmem>>, vector<64x1xi32>
    %2 = arith.sitofp %1 : vector<64x1xi32> to vector<64x1xf32>
    %3 = tpu.iota {dimensions = array<i32: 1>} : vector<64x64xi32>
    %4 = vector.broadcast %0 : vector<64x1xi32> to vector<64x64xi32>
    %5 = arith.cmpi eq, %3, %4 : vector<64x64xi32>
    %6 = arith.extui %5 : vector<64x64xi1> to vector<64x64xi32>
    %7 = arith.sitofp %6 : vector<64x64xi32> to vector<64x64xf32>
    %c0_2 = arith.constant 0 : index
    %c0_3 = arith.constant 0 : index
    %8 = vector.load %arg1[%c0_2, %c0_3] : memref<160x128xf32, #tpu.memory_space<vmem>>, vector<64x48xf32>
    %cst = arith.constant dense<0.000000e+00> : vector<64x48xf32>
    %9 = tpu.matmul %7, %8, %cst {dimension_numbers = #tpu.dot_dimension_numbers<[1], [0], [0], [1], [0, 0, 1, 1], [], []>} : vector<64x64xf32>, vector<64x48xf32>, vector<64x48xf32> -> vector<64x48xf32>
    %c64 = arith.constant 64 : index
    %c0_4 = arith.constant 0 : index
    %10 = vector.load %arg1[%c64, %c0_4] : memref<160x128xf32, #tpu.memory_space<vmem>>, vector<32x48xf32>
    %c96 = arith.constant 96 : index
    %c0_5 = arith.constant 0 : index
    %11 = vector.load %arg1[%c96, %c0_5] : memref<160x128xf32, #tpu.memory_space<vmem>>, vector<4x16xf32>
    %12 = tpu.iota {dimensions = array<i32: 0>} : vector<4x32xi32>
    %13 = tpu.iota {dimensions = array<i32: 1>} : vector<4x32xi32>
    %c2_i32 = arith.constant 2 : i32
    %14 = vector.broadcast %c2_i32 : i32 to vector<4x32xi32>
    %15 = arith.cmpi slt, %12, %14 : vector<4x32xi32>
    %c16_i32 = arith.constant 16 : i32
    %16 = vector.broadcast %c16_i32 : i32 to vector<4x32xi32>
    %17 = arith.cmpi slt, %13, %16 : vector<4x32xi32>
    %18 = arith.xori %15, %17 : vector<4x32xi1>
    %cst_6 = arith.constant dense<true> : vector<4x32xi1>
    %19 = arith.xori %18, %cst_6 : vector<4x32xi1>
    %20 = arith.extui %19 : vector<4x32xi1> to vector<4x32xi32>
    %21 = arith.sitofp %20 : vector<4x32xi32> to vector<4x32xf32>
    %cst_7 = arith.constant 0.000000e+00 : f32
    %22 = vector.broadcast %cst_7 : f32 to vector<4x16xf32>
    %23 = vector.extract_strided_slice %9 {offsets = [0, 0], sizes = [4, 48], strides = [1, 1]} : vector<64x48xf32> to vector<4x48xf32>
    %24 = vector.extract_strided_slice %2 {offsets = [0, 0], sizes = [4, 1], strides = [1, 1]} : vector<64x1xf32> to vector<4x1xf32>
    %25 = tpu.concatenate %22, %22 in 1 : vector<4x16xf32>, vector<4x16xf32> -> vector<4x32xf32>
    %26 = arith.mulf %25, %21 : vector<4x32xf32>
    %cst_8 = arith.constant dense<0.000000e+00> : vector<4x48xf32>
    %27 = tpu.matmul %26, %10, %cst_8 {dimension_numbers = #tpu.dot_dimension_numbers<[1], [0], [0], [1], [0, 0, 1, 1], [], []>} : vector<4x32xf32>, vector<32x48xf32>, vector<4x48xf32> -> vector<4x48xf32>
    %28 = vector.extract_strided_slice %23 {offsets = [0, 0], sizes = [4, 32], strides = [1, 1]} : vector<4x48xf32> to vector<4x32xf32>
    %29 = vector.extract_strided_slice %27 {offsets = [0, 0], sizes = [4, 32], strides = [1, 1]} : vector<4x48xf32> to vector<4x32xf32>
    %30 = arith.addf %28, %29 : vector<4x32xf32>
    %31 = arith.negf %30 : vector<4x32xf32>
    %32 = math.exp %31 : vector<4x32xf32>
    %cst_9 = arith.constant 1.000000e+00 : f32
    %33 = vector.broadcast %cst_9 : f32 to vector<4x32xf32>
    %34 = arith.addf %33, %32 : vector<4x32xf32>
    %35 = arith.divf %33, %34 : vector<4x32xf32>
    %36 = vector.extract_strided_slice %35 {offsets = [0, 0], sizes = [4, 16], strides = [1, 1]} : vector<4x32xf32> to vector<4x16xf32>
    %37 = vector.extract_strided_slice %35 {offsets = [0, 16], sizes = [4, 16], strides = [1, 1]} : vector<4x32xf32> to vector<4x16xf32>
    %38 = vector.extract_strided_slice %23 {offsets = [0, 32], sizes = [4, 16], strides = [1, 1]} : vector<4x48xf32> to vector<4x16xf32>
    %39 = vector.extract_strided_slice %27 {offsets = [0, 32], sizes = [4, 16], strides = [1, 1]} : vector<4x48xf32> to vector<4x16xf32>
    %40 = arith.addf %39, %11 : vector<4x16xf32>
    %41 = arith.mulf %36, %40 : vector<4x16xf32>
    %42 = arith.addf %38, %41 : vector<4x16xf32>
    %43 = math.tanh %42 : vector<4x16xf32>
    %cst_10 = arith.constant 1.000000e+00 : f32
    %44 = vector.broadcast %cst_10 : f32 to vector<4x16xf32>
    %45 = arith.subf %44, %37 : vector<4x16xf32>
    %46 = arith.mulf %45, %43 : vector<4x16xf32>
    %47 = arith.mulf %37, %22 : vector<4x16xf32>
    %48 = arith.addf %46, %47 : vector<4x16xf32>
    %49 = vector.broadcast %24 : vector<4x1xf32> to vector<4x16xf32>
    %50 = arith.mulf %49, %48 : vector<4x16xf32>
    %cst_11 = arith.constant 1.000000e+00 : f32
    %51 = vector.broadcast %cst_11 : f32 to vector<4x1xf32>
    %52 = arith.subf %51, %24 : vector<4x1xf32>
    %53 = vector.broadcast %52 : vector<4x1xf32> to vector<4x16xf32>
    %54 = arith.mulf %53, %22 : vector<4x16xf32>
    %55 = arith.addf %50, %54 : vector<4x16xf32>
    %56 = vector.broadcast %24 : vector<4x1xf32> to vector<4x16xf32>
    %57 = arith.mulf %56, %55 : vector<4x16xf32>
    %58 = vector.extract_strided_slice %57 {offsets = [0, 0], sizes = [2, 16], strides = [1, 1]} : vector<4x16xf32> to vector<2x16xf32>
    %c0_12 = arith.constant 0 : index
    %c0_13 = arith.constant 0 : index
    %59 = vector.load %arg3[%c0_12, %c0_13] : memref<16x32xf32, #tpu.memory_space<vmem>>, vector<2x16xf32>
    tpu.vector_store %arg3[%c0_12, %c0_13], %58 {strides = array<i32>} : memref<16x32xf32, #tpu.memory_space<vmem>>, vector<2x16xf32>,
    %60 = vector.extract_strided_slice %57 {offsets = [2, 0], sizes = [2, 16], strides = [1, 1]} : vector<4x16xf32> to vector<2x16xf32>
    %c14 = arith.constant 14 : index
    %c16 = arith.constant 16 : index
    %61 = vector.load %arg3[%c14, %c16] : memref<16x32xf32, #tpu.memory_space<vmem>>, vector<2x16xf32>
    tpu.vector_store %arg3[%c14, %c16], %60 {strides = array<i32>} : memref<16x32xf32, #tpu.memory_space<vmem>>, vector<2x16xf32>,
    %62 = vector.extract_strided_slice %9 {offsets = [8, 0], sizes = [4, 48], strides = [1, 1]} : vector<64x48xf32> to vector<4x48xf32>
    %63 = vector.extract_strided_slice %2 {offsets = [8, 0], sizes = [4, 1], strides = [1, 1]} : vector<64x1xf32> to vector<4x1xf32>
    %64 = tpu.concatenate %55, %55 in 1 : vector<4x16xf32>, vector<4x16xf32> -> vector<4x32xf32>
    %65 = arith.mulf %64, %21 : vector<4x32xf32>
    %cst_14 = arith.constant dense<0.000000e+00> : vector<4x48xf32>
    %66 = tpu.matmul %65, %10, %cst_14 {dimension_numbers = #tpu.dot_dimension_numbers<[1], [0], [0], [1], [0, 0, 1, 1], [], []>} : vector<4x32xf32>, vector<32x48xf32>, vector<4x48xf32> -> vector<4x48xf32>
    %67 = vector.extract_strided_slice %62 {offsets = [0, 0], sizes = [4, 32], strides = [1, 1]} : vector<4x48xf32> to vector<4x32xf32>
    %68 = vector.extract_strided_slice %66 {offsets = [0, 0], sizes = [4, 32], strides = [1, 1]} : vector<4x48xf32> to vector<4x32xf32>
    %69 = arith.addf %67, %68 : vector<4x32xf32>
    %70 = arith.negf %69 : vector<4x32xf32>
    %71 = math.exp %70 : vector<4x32xf32>
    %cst_15 = arith.constant 1.000000e+00 : f32
    %72 = vector.broadcast %cst_15 : f32 to vector<4x32xf32>
    %73 = arith.addf %72, %71 : vector<4x32xf32>
    %74 = arith.divf %72, %73 : vector<4x32xf32>
    %75 = vector.extract_strided_slice %74 {offsets = [0, 0], sizes = [4, 16], strides = [1, 1]} : vector<4x32xf32> to vector<4x16xf32>
    %76 = vector.extract_strided_slice %74 {offsets = [0, 16], sizes = [4, 16], strides = [1, 1]} : vector<4x32xf32> to vector<4x16xf32>
    %77 = vector.extract_strided_slice %62 {offsets = [0, 32], sizes = [4, 16], strides = [1, 1]} : vector<4x48xf32> to vector<4x16xf32>
    %78 = vector.extract_strided_slice %66 {offsets = [0, 32], sizes = [4, 16], strides = [1, 1]} : vector<4x48xf32> to vector<4x16xf32>
    %79 = arith.addf %78, %11 : vector<4x16xf32>
    %80 = arith.mulf %75, %79 : vector<4x16xf32>
    %81 = arith.addf %77, %80 : vector<4x16xf32>
    %82 = math.tanh %81 : vector<4x16xf32>
    %cst_16 = arith.constant 1.000000e+00 : f32
    %83 = vector.broadcast %cst_16 : f32 to vector<4x16xf32>
    %84 = arith.subf %83, %76 : vector<4x16xf32>
    %85 = arith.mulf %84, %82 : vector<4x16xf32>
    %86 = arith.mulf %76, %55 : vector<4x16xf32>
    %87 = arith.addf %85, %86 : vector<4x16xf32>
    %88 = vector.broadcast %63 : vector<4x1xf32> to vector<4x16xf32>
    %89 = arith.mulf %88, %87 : vector<4x16xf32>
    %cst_17 = arith.constant 1.000000e+00 : f32
    %90 = vector.broadcast %cst_17 : f32 to vector<4x1xf32>
    %91 = arith.subf %90, %63 : vector<4x1xf32>
    %92 = vector.broadcast %91 : vector<4x1xf32> to vector<4x16xf32>
    %93 = arith.mulf %92, %55 : vector<4x16xf32>
    %94 = arith.addf %89, %93 : vector<4x16xf32>
    %95 = vector.broadcast %63 : vector<4x1xf32> to vector<4x16xf32>
    %96 = arith.mulf %95, %94 : vector<4x16xf32>
    %97 = vector.extract_strided_slice %96 {offsets = [0, 0], sizes = [2, 16], strides = [1, 1]} : vector<4x16xf32> to vector<2x16xf32>
    %c2 = arith.constant 2 : index
    %c0_18 = arith.constant 0 : index
    %98 = vector.load %arg3[%c2, %c0_18] : memref<16x32xf32, #tpu.memory_space<vmem>>, vector<2x16xf32>
    tpu.vector_store %arg3[%c2, %c0_18], %97 {strides = array<i32>} : memref<16x32xf32, #tpu.memory_space<vmem>>, vector<2x16xf32>,
    %99 = vector.extract_strided_slice %96 {offsets = [2, 0], sizes = [2, 16], strides = [1, 1]} : vector<4x16xf32> to vector<2x16xf32>
    %c12 = arith.constant 12 : index
    %c16_19 = arith.constant 16 : index
    %100 = vector.load %arg3[%c12, %c16_19] : memref<16x32xf32, #tpu.memory_space<vmem>>, vector<2x16xf32>
    tpu.vector_store %arg3[%c12, %c16_19], %99 {strides = array<i32>} : memref<16x32xf32, #tpu.memory_space<vmem>>, vector<2x16xf32>,
    %101 = vector.extract_strided_slice %9 {offsets = [16, 0], sizes = [4, 48], strides = [1, 1]} : vector<64x48xf32> to vector<4x48xf32>
    %102 = vector.extract_strided_slice %2 {offsets = [16, 0], sizes = [4, 1], strides = [1, 1]} : vector<64x1xf32> to vector<4x1xf32>
    %103 = tpu.concatenate %94, %94 in 1 : vector<4x16xf32>, vector<4x16xf32> -> vector<4x32xf32>
    %104 = arith.mulf %103, %21 : vector<4x32xf32>
    %cst_20 = arith.constant dense<0.000000e+00> : vector<4x48xf32>
    %105 = tpu.matmul %104, %10, %cst_20 {dimension_numbers = #tpu.dot_dimension_numbers<[1], [0], [0], [1], [0, 0, 1, 1], [], []>} : vector<4x32xf32>, vector<32x48xf32>, vector<4x48xf32> -> vector<4x48xf32>
    %106 = vector.extract_strided_slice %101 {offsets = [0, 0], sizes = [4, 32], strides = [1, 1]} : vector<4x48xf32> to vector<4x32xf32>
    %107 = vector.extract_strided_slice %105 {offsets = [0, 0], sizes = [4, 32], strides = [1, 1]} : vector<4x48xf32> to vector<4x32xf32>
    %108 = arith.addf %106, %107 : vector<4x32xf32>
    %109 = arith.negf %108 : vector<4x32xf32>
    %110 = math.exp %109 : vector<4x32xf32>
    %cst_21 = arith.constant 1.000000e+00 : f32
    %111 = vector.broadcast %cst_21 : f32 to vector<4x32xf32>
    %112 = arith.addf %111, %110 : vector<4x32xf32>
    %113 = arith.divf %111, %112 : vector<4x32xf32>
    %114 = vector.extract_strided_slice %113 {offsets = [0, 0], sizes = [4, 16], strides = [1, 1]} : vector<4x32xf32> to vector<4x16xf32>
    %115 = vector.extract_strided_slice %113 {offsets = [0, 16], sizes = [4, 16], strides = [1, 1]} : vector<4x32xf32> to vector<4x16xf32>
    %116 = vector.extract_strided_slice %101 {offsets = [0, 32], sizes = [4, 16], strides = [1, 1]} : vector<4x48xf32> to vector<4x16xf32>
    %117 = vector.extract_strided_slice %105 {offsets = [0, 32], sizes = [4, 16], strides = [1, 1]} : vector<4x48xf32> to vector<4x16xf32>
    %118 = arith.addf %117, %11 : vector<4x16xf32>
    %119 = arith.mulf %114, %118 : vector<4x16xf32>
    %120 = arith.addf %116, %119 : vector<4x16xf32>
    %121 = math.tanh %120 : vector<4x16xf32>
    %cst_22 = arith.constant 1.000000e+00 : f32
    %122 = vector.broadcast %cst_22 : f32 to vector<4x16xf32>
    %123 = arith.subf %122, %115 : vector<4x16xf32>
    %124 = arith.mulf %123, %121 : vector<4x16xf32>
    %125 = arith.mulf %115, %94 : vector<4x16xf32>
    %126 = arith.addf %124, %125 : vector<4x16xf32>
    %127 = vector.broadcast %102 : vector<4x1xf32> to vector<4x16xf32>
    %128 = arith.mulf %127, %126 : vector<4x16xf32>
    %cst_23 = arith.constant 1.000000e+00 : f32
    %129 = vector.broadcast %cst_23 : f32 to vector<4x1xf32>
    %130 = arith.subf %129, %102 : vector<4x1xf32>
    %131 = vector.broadcast %130 : vector<4x1xf32> to vector<4x16xf32>
    %132 = arith.mulf %131, %94 : vector<4x16xf32>
    %133 = arith.addf %128, %132 : vector<4x16xf32>
    %134 = vector.broadcast %102 : vector<4x1xf32> to vector<4x16xf32>
    %135 = arith.mulf %134, %133 : vector<4x16xf32>
    %136 = vector.extract_strided_slice %135 {offsets = [0, 0], sizes = [2, 16], strides = [1, 1]} : vector<4x16xf32> to vector<2x16xf32>
    %c4 = arith.constant 4 : index
    %c0_24 = arith.constant 0 : index
    %137 = vector.load %arg3[%c4, %c0_24] : memref<16x32xf32, #tpu.memory_space<vmem>>, vector<2x16xf32>
    tpu.vector_store %arg3[%c4, %c0_24], %136 {strides = array<i32>} : memref<16x32xf32, #tpu.memory_space<vmem>>, vector<2x16xf32>,
    %138 = vector.extract_strided_slice %135 {offsets = [2, 0], sizes = [2, 16], strides = [1, 1]} : vector<4x16xf32> to vector<2x16xf32>
    %c10 = arith.constant 10 : index
    %c16_25 = arith.constant 16 : index
    %139 = vector.load %arg3[%c10, %c16_25] : memref<16x32xf32, #tpu.memory_space<vmem>>, vector<2x16xf32>
    tpu.vector_store %arg3[%c10, %c16_25], %138 {strides = array<i32>} : memref<16x32xf32, #tpu.memory_space<vmem>>, vector<2x16xf32>,
    %140 = vector.extract_strided_slice %9 {offsets = [24, 0], sizes = [4, 48], strides = [1, 1]} : vector<64x48xf32> to vector<4x48xf32>
    %141 = vector.extract_strided_slice %2 {offsets = [24, 0], sizes = [4, 1], strides = [1, 1]} : vector<64x1xf32> to vector<4x1xf32>
    %142 = tpu.concatenate %133, %133 in 1 : vector<4x16xf32>, vector<4x16xf32> -> vector<4x32xf32>
    %143 = arith.mulf %142, %21 : vector<4x32xf32>
    %cst_26 = arith.constant dense<0.000000e+00> : vector<4x48xf32>
    %144 = tpu.matmul %143, %10, %cst_26 {dimension_numbers = #tpu.dot_dimension_numbers<[1], [0], [0], [1], [0, 0, 1, 1], [], []>} : vector<4x32xf32>, vector<32x48xf32>, vector<4x48xf32> -> vector<4x48xf32>
    %145 = vector.extract_strided_slice %140 {offsets = [0, 0], sizes = [4, 32], strides = [1, 1]} : vector<4x48xf32> to vector<4x32xf32>
    %146 = vector.extract_strided_slice %144 {offsets = [0, 0], sizes = [4, 32], strides = [1, 1]} : vector<4x48xf32> to vector<4x32xf32>
    %147 = arith.addf %145, %146 : vector<4x32xf32>
    %148 = arith.negf %147 : vector<4x32xf32>
    %149 = math.exp %148 : vector<4x32xf32>
    %cst_27 = arith.constant 1.000000e+00 : f32
    %150 = vector.broadcast %cst_27 : f32 to vector<4x32xf32>
    %151 = arith.addf %150, %149 : vector<4x32xf32>
    %152 = arith.divf %150, %151 : vector<4x32xf32>
    %153 = vector.extract_strided_slice %152 {offsets = [0, 0], sizes = [4, 16], strides = [1, 1]} : vector<4x32xf32> to vector<4x16xf32>
    %154 = vector.extract_strided_slice %152 {offsets = [0, 16], sizes = [4, 16], strides = [1, 1]} : vector<4x32xf32> to vector<4x16xf32>
    %155 = vector.extract_strided_slice %140 {offsets = [0, 32], sizes = [4, 16], strides = [1, 1]} : vector<4x48xf32> to vector<4x16xf32>
    %156 = vector.extract_strided_slice %144 {offsets = [0, 32], sizes = [4, 16], strides = [1, 1]} : vector<4x48xf32> to vector<4x16xf32>
    %157 = arith.addf %156, %11 : vector<4x16xf32>
    %158 = arith.mulf %153, %157 : vector<4x16xf32>
    %159 = arith.addf %155, %158 : vector<4x16xf32>
    %160 = math.tanh %159 : vector<4x16xf32>
    %cst_28 = arith.constant 1.000000e+00 : f32
    %161 = vector.broadcast %cst_28 : f32 to vector<4x16xf32>
    %162 = arith.subf %161, %154 : vector<4x16xf32>
    %163 = arith.mulf %162, %160 : vector<4x16xf32>
    %164 = arith.mulf %154, %133 : vector<4x16xf32>
    %165 = arith.addf %163, %164 : vector<4x16xf32>
    %166 = vector.broadcast %141 : vector<4x1xf32> to vector<4x16xf32>
    %167 = arith.mulf %166, %165 : vector<4x16xf32>
    %cst_29 = arith.constant 1.000000e+00 : f32
    %168 = vector.broadcast %cst_29 : f32 to vector<4x1xf32>
    %169 = arith.subf %168, %141 : vector<4x1xf32>
    %170 = vector.broadcast %169 : vector<4x1xf32> to vector<4x16xf32>
    %171 = arith.mulf %170, %133 : vector<4x16xf32>
    %172 = arith.addf %167, %171 : vector<4x16xf32>
    %173 = vector.broadcast %141 : vector<4x1xf32> to vector<4x16xf32>
    %174 = arith.mulf %173, %172 : vector<4x16xf32>
    %175 = vector.extract_strided_slice %174 {offsets = [0, 0], sizes = [2, 16], strides = [1, 1]} : vector<4x16xf32> to vector<2x16xf32>
    %c6 = arith.constant 6 : index
    %c0_30 = arith.constant 0 : index
    %176 = vector.load %arg3[%c6, %c0_30] : memref<16x32xf32, #tpu.memory_space<vmem>>, vector<2x16xf32>
    tpu.vector_store %arg3[%c6, %c0_30], %175 {strides = array<i32>} : memref<16x32xf32, #tpu.memory_space<vmem>>, vector<2x16xf32>,
    %177 = vector.extract_strided_slice %174 {offsets = [2, 0], sizes = [2, 16], strides = [1, 1]} : vector<4x16xf32> to vector<2x16xf32>
    %c8 = arith.constant 8 : index
    %c16_31 = arith.constant 16 : index
    %178 = vector.load %arg3[%c8, %c16_31] : memref<16x32xf32, #tpu.memory_space<vmem>>, vector<2x16xf32>
    tpu.vector_store %arg3[%c8, %c16_31], %177 {strides = array<i32>} : memref<16x32xf32, #tpu.memory_space<vmem>>, vector<2x16xf32>,
    %179 = vector.extract_strided_slice %9 {offsets = [32, 0], sizes = [4, 48], strides = [1, 1]} : vector<64x48xf32> to vector<4x48xf32>
    %180 = vector.extract_strided_slice %2 {offsets = [32, 0], sizes = [4, 1], strides = [1, 1]} : vector<64x1xf32> to vector<4x1xf32>
    %181 = tpu.concatenate %172, %172 in 1 : vector<4x16xf32>, vector<4x16xf32> -> vector<4x32xf32>
    %182 = arith.mulf %181, %21 : vector<4x32xf32>
    %cst_32 = arith.constant dense<0.000000e+00> : vector<4x48xf32>
    %183 = tpu.matmul %182, %10, %cst_32 {dimension_numbers = #tpu.dot_dimension_numbers<[1], [0], [0], [1], [0, 0, 1, 1], [], []>} : vector<4x32xf32>, vector<32x48xf32>, vector<4x48xf32> -> vector<4x48xf32>
    %184 = vector.extract_strided_slice %179 {offsets = [0, 0], sizes = [4, 32], strides = [1, 1]} : vector<4x48xf32> to vector<4x32xf32>
    %185 = vector.extract_strided_slice %183 {offsets = [0, 0], sizes = [4, 32], strides = [1, 1]} : vector<4x48xf32> to vector<4x32xf32>
    %186 = arith.addf %184, %185 : vector<4x32xf32>
    %187 = arith.negf %186 : vector<4x32xf32>
    %188 = math.exp %187 : vector<4x32xf32>
    %cst_33 = arith.constant 1.000000e+00 : f32
    %189 = vector.broadcast %cst_33 : f32 to vector<4x32xf32>
    %190 = arith.addf %189, %188 : vector<4x32xf32>
    %191 = arith.divf %189, %190 : vector<4x32xf32>
    %192 = vector.extract_strided_slice %191 {offsets = [0, 0], sizes = [4, 16], strides = [1, 1]} : vector<4x32xf32> to vector<4x16xf32>
    %193 = vector.extract_strided_slice %191 {offsets = [0, 16], sizes = [4, 16], strides = [1, 1]} : vector<4x32xf32> to vector<4x16xf32>
    %194 = vector.extract_strided_slice %179 {offsets = [0, 32], sizes = [4, 16], strides = [1, 1]} : vector<4x48xf32> to vector<4x16xf32>
    %195 = vector.extract_strided_slice %183 {offsets = [0, 32], sizes = [4, 16], strides = [1, 1]} : vector<4x48xf32> to vector<4x16xf32>
    %196 = arith.addf %195, %11 : vector<4x16xf32>
    %197 = arith.mulf %192, %196 : vector<4x16xf32>
    %198 = arith.addf %194, %197 : vector<4x16xf32>
    %199 = math.tanh %198 : vector<4x16xf32>
    %cst_34 = arith.constant 1.000000e+00 : f32
    %200 = vector.broadcast %cst_34 : f32 to vector<4x16xf32>
    %201 = arith.subf %200, %193 : vector<4x16xf32>
    %202 = arith.mulf %201, %199 : vector<4x16xf32>
    %203 = arith.mulf %193, %172 : vector<4x16xf32>
    %204 = arith.addf %202, %203 : vector<4x16xf32>
    %205 = vector.broadcast %180 : vector<4x1xf32> to vector<4x16xf32>
    %206 = arith.mulf %205, %204 : vector<4x16xf32>
    %cst_35 = arith.constant 1.000000e+00 : f32
    %207 = vector.broadcast %cst_35 : f32 to vector<4x1xf32>
    %208 = arith.subf %207, %180 : vector<4x1xf32>
    %209 = vector.broadcast %208 : vector<4x1xf32> to vector<4x16xf32>
    %210 = arith.mulf %209, %172 : vector<4x16xf32>
    %211 = arith.addf %206, %210 : vector<4x16xf32>
    %212 = vector.broadcast %180 : vector<4x1xf32> to vector<4x16xf32>
    %213 = arith.mulf %212, %211 : vector<4x16xf32>
    %214 = vector.extract_strided_slice %213 {offsets = [0, 0], sizes = [2, 16], strides = [1, 1]} : vector<4x16xf32> to vector<2x16xf32>
    %c8_36 = arith.constant 8 : index
    %c0_37 = arith.constant 0 : index
    %215 = vector.load %arg3[%c8_36, %c0_37] : memref<16x32xf32, #tpu.memory_space<vmem>>, vector<2x16xf32>
    tpu.vector_store %arg3[%c8_36, %c0_37], %214 {strides = array<i32>} : memref<16x32xf32, #tpu.memory_space<vmem>>, vector<2x16xf32>,
    %216 = vector.extract_strided_slice %213 {offsets = [2, 0], sizes = [2, 16], strides = [1, 1]} : vector<4x16xf32> to vector<2x16xf32>
    %c6_38 = arith.constant 6 : index
    %c16_39 = arith.constant 16 : index
    %217 = vector.load %arg3[%c6_38, %c16_39] : memref<16x32xf32, #tpu.memory_space<vmem>>, vector<2x16xf32>
    tpu.vector_store %arg3[%c6_38, %c16_39], %216 {strides = array<i32>} : memref<16x32xf32, #tpu.memory_space<vmem>>, vector<2x16xf32>,
    %218 = vector.extract_strided_slice %9 {offsets = [40, 0], sizes = [4, 48], strides = [1, 1]} : vector<64x48xf32> to vector<4x48xf32>
    %219 = vector.extract_strided_slice %2 {offsets = [40, 0], sizes = [4, 1], strides = [1, 1]} : vector<64x1xf32> to vector<4x1xf32>
    %220 = tpu.concatenate %211, %211 in 1 : vector<4x16xf32>, vector<4x16xf32> -> vector<4x32xf32>
    %221 = arith.mulf %220, %21 : vector<4x32xf32>
    %cst_40 = arith.constant dense<0.000000e+00> : vector<4x48xf32>
    %222 = tpu.matmul %221, %10, %cst_40 {dimension_numbers = #tpu.dot_dimension_numbers<[1], [0], [0], [1], [0, 0, 1, 1], [], []>} : vector<4x32xf32>, vector<32x48xf32>, vector<4x48xf32> -> vector<4x48xf32>
    %223 = vector.extract_strided_slice %218 {offsets = [0, 0], sizes = [4, 32], strides = [1, 1]} : vector<4x48xf32> to vector<4x32xf32>
    %224 = vector.extract_strided_slice %222 {offsets = [0, 0], sizes = [4, 32], strides = [1, 1]} : vector<4x48xf32> to vector<4x32xf32>
    %225 = arith.addf %223, %224 : vector<4x32xf32>
    %226 = arith.negf %225 : vector<4x32xf32>
    %227 = math.exp %226 : vector<4x32xf32>
    %cst_41 = arith.constant 1.000000e+00 : f32
    %228 = vector.broadcast %cst_41 : f32 to vector<4x32xf32>
    %229 = arith.addf %228, %227 : vector<4x32xf32>
    %230 = arith.divf %228, %229 : vector<4x32xf32>
    %231 = vector.extract_strided_slice %230 {offsets = [0, 0], sizes = [4, 16], strides = [1, 1]} : vector<4x32xf32> to vector<4x16xf32>
    %232 = vector.extract_strided_slice %230 {offsets = [0, 16], sizes = [4, 16], strides = [1, 1]} : vector<4x32xf32> to vector<4x16xf32>
    %233 = vector.extract_strided_slice %218 {offsets = [0, 32], sizes = [4, 16], strides = [1, 1]} : vector<4x48xf32> to vector<4x16xf32>
    %234 = vector.extract_strided_slice %222 {offsets = [0, 32], sizes = [4, 16], strides = [1, 1]} : vector<4x48xf32> to vector<4x16xf32>
    %235 = arith.addf %234, %11 : vector<4x16xf32>
    %236 = arith.mulf %231, %235 : vector<4x16xf32>
    %237 = arith.addf %233, %236 : vector<4x16xf32>
    %238 = math.tanh %237 : vector<4x16xf32>
    %cst_42 = arith.constant 1.000000e+00 : f32
    %239 = vector.broadcast %cst_42 : f32 to vector<4x16xf32>
    %240 = arith.subf %239, %232 : vector<4x16xf32>
    %241 = arith.mulf %240, %238 : vector<4x16xf32>
    %242 = arith.mulf %232, %211 : vector<4x16xf32>
    %243 = arith.addf %241, %242 : vector<4x16xf32>
    %244 = vector.broadcast %219 : vector<4x1xf32> to vector<4x16xf32>
    %245 = arith.mulf %244, %243 : vector<4x16xf32>
    %cst_43 = arith.constant 1.000000e+00 : f32
    %246 = vector.broadcast %cst_43 : f32 to vector<4x1xf32>
    %247 = arith.subf %246, %219 : vector<4x1xf32>
    %248 = vector.broadcast %247 : vector<4x1xf32> to vector<4x16xf32>
    %249 = arith.mulf %248, %211 : vector<4x16xf32>
    %250 = arith.addf %245, %249 : vector<4x16xf32>
    %251 = vector.broadcast %219 : vector<4x1xf32> to vector<4x16xf32>
    %252 = arith.mulf %251, %250 : vector<4x16xf32>
    %253 = vector.extract_strided_slice %252 {offsets = [0, 0], sizes = [2, 16], strides = [1, 1]} : vector<4x16xf32> to vector<2x16xf32>
    %c10_44 = arith.constant 10 : index
    %c0_45 = arith.constant 0 : index
    %254 = vector.load %arg3[%c10_44, %c0_45] : memref<16x32xf32, #tpu.memory_space<vmem>>, vector<2x16xf32>
    tpu.vector_store %arg3[%c10_44, %c0_45], %253 {strides = array<i32>} : memref<16x32xf32, #tpu.memory_space<vmem>>, vector<2x16xf32>,
    %255 = vector.extract_strided_slice %252 {offsets = [2, 0], sizes = [2, 16], strides = [1, 1]} : vector<4x16xf32> to vector<2x16xf32>
    %c4_46 = arith.constant 4 : index
    %c16_47 = arith.constant 16 : index
    %256 = vector.load %arg3[%c4_46, %c16_47] : memref<16x32xf32, #tpu.memory_space<vmem>>, vector<2x16xf32>
    tpu.vector_store %arg3[%c4_46, %c16_47], %255 {strides = array<i32>} : memref<16x32xf32, #tpu.memory_space<vmem>>, vector<2x16xf32>,
    %257 = vector.extract_strided_slice %9 {offsets = [48, 0], sizes = [4, 48], strides = [1, 1]} : vector<64x48xf32> to vector<4x48xf32>
    %258 = vector.extract_strided_slice %2 {offsets = [48, 0], sizes = [4, 1], strides = [1, 1]} : vector<64x1xf32> to vector<4x1xf32>
    %259 = tpu.concatenate %250, %250 in 1 : vector<4x16xf32>, vector<4x16xf32> -> vector<4x32xf32>
    %260 = arith.mulf %259, %21 : vector<4x32xf32>
    %cst_48 = arith.constant dense<0.000000e+00> : vector<4x48xf32>
    %261 = tpu.matmul %260, %10, %cst_48 {dimension_numbers = #tpu.dot_dimension_numbers<[1], [0], [0], [1], [0, 0, 1, 1], [], []>} : vector<4x32xf32>, vector<32x48xf32>, vector<4x48xf32> -> vector<4x48xf32>
    %262 = vector.extract_strided_slice %257 {offsets = [0, 0], sizes = [4, 32], strides = [1, 1]} : vector<4x48xf32> to vector<4x32xf32>
    %263 = vector.extract_strided_slice %261 {offsets = [0, 0], sizes = [4, 32], strides = [1, 1]} : vector<4x48xf32> to vector<4x32xf32>
    %264 = arith.addf %262, %263 : vector<4x32xf32>
    %265 = arith.negf %264 : vector<4x32xf32>
    %266 = math.exp %265 : vector<4x32xf32>
    %cst_49 = arith.constant 1.000000e+00 : f32
    %267 = vector.broadcast %cst_49 : f32 to vector<4x32xf32>
    %268 = arith.addf %267, %266 : vector<4x32xf32>
    %269 = arith.divf %267, %268 : vector<4x32xf32>
    %270 = vector.extract_strided_slice %269 {offsets = [0, 0], sizes = [4, 16], strides = [1, 1]} : vector<4x32xf32> to vector<4x16xf32>
    %271 = vector.extract_strided_slice %269 {offsets = [0, 16], sizes = [4, 16], strides = [1, 1]} : vector<4x32xf32> to vector<4x16xf32>
    %272 = vector.extract_strided_slice %257 {offsets = [0, 32], sizes = [4, 16], strides = [1, 1]} : vector<4x48xf32> to vector<4x16xf32>
    %273 = vector.extract_strided_slice %261 {offsets = [0, 32], sizes = [4, 16], strides = [1, 1]} : vector<4x48xf32> to vector<4x16xf32>
    %274 = arith.addf %273, %11 : vector<4x16xf32>
    %275 = arith.mulf %270, %274 : vector<4x16xf32>
    %276 = arith.addf %272, %275 : vector<4x16xf32>
    %277 = math.tanh %276 : vector<4x16xf32>
    %cst_50 = arith.constant 1.000000e+00 : f32
    %278 = vector.broadcast %cst_50 : f32 to vector<4x16xf32>
    %279 = arith.subf %278, %271 : vector<4x16xf32>
    %280 = arith.mulf %279, %277 : vector<4x16xf32>
    %281 = arith.mulf %271, %250 : vector<4x16xf32>
    %282 = arith.addf %280, %281 : vector<4x16xf32>
    %283 = vector.broadcast %258 : vector<4x1xf32> to vector<4x16xf32>
    %284 = arith.mulf %283, %282 : vector<4x16xf32>
    %cst_51 = arith.constant 1.000000e+00 : f32
    %285 = vector.broadcast %cst_51 : f32 to vector<4x1xf32>
    %286 = arith.subf %285, %258 : vector<4x1xf32>
    %287 = vector.broadcast %286 : vector<4x1xf32> to vector<4x16xf32>
    %288 = arith.mulf %287, %250 : vector<4x16xf32>
    %289 = arith.addf %284, %288 : vector<4x16xf32>
    %290 = vector.broadcast %258 : vector<4x1xf32> to vector<4x16xf32>
    %291 = arith.mulf %290, %289 : vector<4x16xf32>
    %292 = vector.extract_strided_slice %291 {offsets = [0, 0], sizes = [2, 16], strides = [1, 1]} : vector<4x16xf32> to vector<2x16xf32>
    %c12_52 = arith.constant 12 : index
    %c0_53 = arith.constant 0 : index
    %293 = vector.load %arg3[%c12_52, %c0_53] : memref<16x32xf32, #tpu.memory_space<vmem>>, vector<2x16xf32>
    tpu.vector_store %arg3[%c12_52, %c0_53], %292 {strides = array<i32>} : memref<16x32xf32, #tpu.memory_space<vmem>>, vector<2x16xf32>,
    %294 = vector.extract_strided_slice %291 {offsets = [2, 0], sizes = [2, 16], strides = [1, 1]} : vector<4x16xf32> to vector<2x16xf32>
    %c2_54 = arith.constant 2 : index
    %c16_55 = arith.constant 16 : index
    %295 = vector.load %arg3[%c2_54, %c16_55] : memref<16x32xf32, #tpu.memory_space<vmem>>, vector<2x16xf32>
    tpu.vector_store %arg3[%c2_54, %c16_55], %294 {strides = array<i32>} : memref<16x32xf32, #tpu.memory_space<vmem>>, vector<2x16xf32>,
    %296 = vector.extract_strided_slice %9 {offsets = [56, 0], sizes = [4, 48], strides = [1, 1]} : vector<64x48xf32> to vector<4x48xf32>
    %297 = vector.extract_strided_slice %2 {offsets = [56, 0], sizes = [4, 1], strides = [1, 1]} : vector<64x1xf32> to vector<4x1xf32>
    %298 = tpu.concatenate %289, %289 in 1 : vector<4x16xf32>, vector<4x16xf32> -> vector<4x32xf32>
    %299 = arith.mulf %298, %21 : vector<4x32xf32>
    %cst_56 = arith.constant dense<0.000000e+00> : vector<4x48xf32>
    %300 = tpu.matmul %299, %10, %cst_56 {dimension_numbers = #tpu.dot_dimension_numbers<[1], [0], [0], [1], [0, 0, 1, 1], [], []>} : vector<4x32xf32>, vector<32x48xf32>, vector<4x48xf32> -> vector<4x48xf32>
    %301 = vector.extract_strided_slice %296 {offsets = [0, 0], sizes = [4, 32], strides = [1, 1]} : vector<4x48xf32> to vector<4x32xf32>
    %302 = vector.extract_strided_slice %300 {offsets = [0, 0], sizes = [4, 32], strides = [1, 1]} : vector<4x48xf32> to vector<4x32xf32>
    %303 = arith.addf %301, %302 : vector<4x32xf32>
    %304 = arith.negf %303 : vector<4x32xf32>
    %305 = math.exp %304 : vector<4x32xf32>
    %cst_57 = arith.constant 1.000000e+00 : f32
    %306 = vector.broadcast %cst_57 : f32 to vector<4x32xf32>
    %307 = arith.addf %306, %305 : vector<4x32xf32>
    %308 = arith.divf %306, %307 : vector<4x32xf32>
    %309 = vector.extract_strided_slice %308 {offsets = [0, 0], sizes = [4, 16], strides = [1, 1]} : vector<4x32xf32> to vector<4x16xf32>
    %310 = vector.extract_strided_slice %308 {offsets = [0, 16], sizes = [4, 16], strides = [1, 1]} : vector<4x32xf32> to vector<4x16xf32>
    %311 = vector.extract_strided_slice %296 {offsets = [0, 32], sizes = [4, 16], strides = [1, 1]} : vector<4x48xf32> to vector<4x16xf32>
    %312 = vector.extract_strided_slice %300 {offsets = [0, 32], sizes = [4, 16], strides = [1, 1]} : vector<4x48xf32> to vector<4x16xf32>
    %313 = arith.addf %312, %11 : vector<4x16xf32>
    %314 = arith.mulf %309, %313 : vector<4x16xf32>
    %315 = arith.addf %311, %314 : vector<4x16xf32>
    %316 = math.tanh %315 : vector<4x16xf32>
    %cst_58 = arith.constant 1.000000e+00 : f32
    %317 = vector.broadcast %cst_58 : f32 to vector<4x16xf32>
    %318 = arith.subf %317, %310 : vector<4x16xf32>
    %319 = arith.mulf %318, %316 : vector<4x16xf32>
    %320 = arith.mulf %310, %289 : vector<4x16xf32>
    %321 = arith.addf %319, %320 : vector<4x16xf32>
    %322 = vector.broadcast %297 : vector<4x1xf32> to vector<4x16xf32>
    %323 = arith.mulf %322, %321 : vector<4x16xf32>
    %cst_59 = arith.constant 1.000000e+00 : f32
    %324 = vector.broadcast %cst_59 : f32 to vector<4x1xf32>
    %325 = arith.subf %324, %297 : vector<4x1xf32>
    %326 = vector.broadcast %325 : vector<4x1xf32> to vector<4x16xf32>
    %327 = arith.mulf %326, %289 : vector<4x16xf32>
    %328 = arith.addf %323, %327 : vector<4x16xf32>
    %329 = vector.broadcast %297 : vector<4x1xf32> to vector<4x16xf32>
    %330 = arith.mulf %329, %328 : vector<4x16xf32>
    %331 = vector.extract_strided_slice %330 {offsets = [0, 0], sizes = [2, 16], strides = [1, 1]} : vector<4x16xf32> to vector<2x16xf32>
    %c14_60 = arith.constant 14 : index
    %c0_61 = arith.constant 0 : index
    %332 = vector.load %arg3[%c14_60, %c0_61] : memref<16x32xf32, #tpu.memory_space<vmem>>, vector<2x16xf32>
    tpu.vector_store %arg3[%c14_60, %c0_61], %331 {strides = array<i32>} : memref<16x32xf32, #tpu.memory_space<vmem>>, vector<2x16xf32>,
    %333 = vector.extract_strided_slice %330 {offsets = [2, 0], sizes = [2, 16], strides = [1, 1]} : vector<4x16xf32> to vector<2x16xf32>
    %c0_62 = arith.constant 0 : index
    %c16_63 = arith.constant 16 : index
    %334 = vector.load %arg3[%c0_62, %c16_63] : memref<16x32xf32, #tpu.memory_space<vmem>>, vector<2x16xf32>
    tpu.vector_store %arg3[%c0_62, %c16_63], %333 {strides = array<i32>} : memref<16x32xf32, #tpu.memory_space<vmem>>, vector<2x16xf32>,
    %c0_64 = arith.constant 0 : index
    %c0_65 = arith.constant 0 : index
    %335 = vector.load %arg3[%c0_64, %c0_65] : memref<16x32xf32, #tpu.memory_space<vmem>>, vector<16x32xf32>
    %c104 = arith.constant 104 : index
    %c0_66 = arith.constant 0 : index
    %336 = vector.load %arg1[%c104, %c0_66] : memref<160x128xf32, #tpu.memory_space<vmem>>, vector<32x8xf32>
    %c136 = arith.constant 136 : index
    %c0_67 = arith.constant 0 : index
    %337 = vector.load %arg1[%c136, %c0_67] : memref<160x128xf32, #tpu.memory_space<vmem>>, vector<1x8xf32>
    %c144 = arith.constant 144 : index
    %c0_68 = arith.constant 0 : index
    %338 = vector.load %arg1[%c144, %c0_68] : memref<160x128xf32, #tpu.memory_space<vmem>>, vector<8x128xf32>
    %c152 = arith.constant 152 : index
    %c0_69 = arith.constant 0 : index
    %339 = vector.load %arg1[%c152, %c0_69] : memref<160x128xf32, #tpu.memory_space<vmem>>, vector<1x128xf32>
    %cst_70 = arith.constant dense<0.000000e+00> : vector<16x8xf32>
    %340 = tpu.matmul %335, %336, %cst_70 {dimension_numbers = #tpu.dot_dimension_numbers<[1], [0], [0], [1], [0, 0, 1, 1], [], []>} : vector<16x32xf32>, vector<32x8xf32>, vector<16x8xf32> -> vector<16x8xf32>
    %341 = vector.broadcast %337 : vector<1x8xf32> to vector<16x8xf32>
    %342 = arith.addf %340, %341 : vector<16x8xf32>
    %cst_71 = arith.constant 0.000000e+00 : f32
    %343 = vector.broadcast %cst_71 : f32 to vector<16x8xf32>
    %344 = arith.maximumf %342, %343 : vector<16x8xf32>
    %cst_72 = arith.constant dense<0.000000e+00> : vector<16x128xf32>
    %345 = tpu.matmul %344, %338, %cst_72 {dimension_numbers = #tpu.dot_dimension_numbers<[1], [0], [0], [1], [0, 0, 1, 1], [], []>} : vector<16x8xf32>, vector<8x128xf32>, vector<16x128xf32> -> vector<16x128xf32>
    %346 = vector.broadcast %339 : vector<1x128xf32> to vector<16x128xf32>
    %347 = arith.addf %345, %346 : vector<16x128xf32>
    %c0_73 = arith.constant 0 : index
    %c0_74 = arith.constant 0 : index
    %348 = vector.load %arg2[%c0_73, %c0_74] : memref<16x128xf32, #tpu.memory_space<vmem>>, vector<16x128xf32>
    tpu.vector_store %arg2[%c0_73, %c0_74], %347 {strides = array<i32>} : memref<16x128xf32, #tpu.memory_space<vmem>>, vector<16x128xf32>,
    return
  }
}

</mosaic_0001>

<llo_original>
// kernel: interstitial_forward.1
$region0: #{interstitial_forward.1}
  #allocation0 [shape = 'u32[]', space=smem, size = 0x4, offset = 0x4, fixed_abs, tag = 'smem constant byte address 0x4 - core index']
  #allocation1 [shape = 'u32[72,128]{1,0:T(1,128)}', space=vmem, size = 0x9000, scoped, tag = 'internal scratch']
  #allocation2 [shape = 'f32[16,32]{1,0:T(8,128)}', space=vmem, size = 0x2000, scoped, tag = 'scratch operand']
  %s0 = inlined_call_operand.vmem [shape: s32[64,2], index: 0, kind: input, shape index: {}]
  %s1 = inlined_call_operand.hbm [shape: f32[160,128], index: 1, kind: input, shape index: {}]
  %s2 = inlined_call_operand.vmem [shape: f32[16,128], index: 2, kind: output, shape index: {}]
  %s3 = sld [smem:[#allocation0]]
  $region22: #{interstitial_forward.1} parent=0
    _
  %s5 = ssub.s32 1, %s3
  %s6 = scalar_select 0, %s5, %s3
  $region1: #{interstitial_forward.1} parent=0
    #allocation3 [shape = 'u8[81920]{0}', space=vmem, size = 0x14000, scoped, tag = 'input window, operand 1, single buffered']
    #allocation4 [shape = 's32[1]{0}', space=sflag, size = 0x4, scoped, tag = 'scoped memory for interstitial_forward.1']
    %7 = vsyncpa [#allocation4], 0
    // Predicated region
    $region2: #{interstitial_forward.1} parent=1 // pred_check
      _
    $region3: #{interstitial_forward.1} parent=1 // pred_check_branch
      %9 = sbr.rel (0) target = $region5
    $region4: #{interstitial_forward.1} parent=1 // pred_region
      _
    $region5: #{interstitial_forward.1} parent=1 // pred_fallthru
      _
    // Predicated region
    $region6: #{interstitial_forward.1} parent=1 // pred_check
      _
    $region7: #{interstitial_forward.1} parent=1 // pred_check_branch
      %11 = sbr.rel (0) target = $region9
    $region8: #{interstitial_forward.1} parent=1 // pred_region
      %13 = vsyncadd [#allocation4], 0
      %s14 = sshll.u32 %s1, 4
      %s15 = int_to_ptr.hbm [resolvable:$true] %s14
      %s16 = sshll.u32 [#allocation3], 4
      %s17 = int_to_ptr.vmem [resolvable:$true] %s16
      %22 = dma.hbm_to_vmem [thread:$0]  %s15, 2560, %s17, [#allocation4], 128, 128, 8
    $region9: #{interstitial_forward.1} parent=1 // pred_fallthru
      _
    // Predicated region
    $region10: #{interstitial_forward.1} parent=1 // pred_check
      _
    $region11: #{interstitial_forward.1} parent=1 // pred_check_branch
      %24 = sbr.rel (0) target = $region13
    $region12: #{interstitial_forward.1} parent=1 // pred_region
      %26 = dma.done [#allocation4], 2560
    $region13: #{interstitial_forward.1} parent=1 // pred_fallthru
      _
    %v27 = vld [vmem:[%s0] sm:$0xff]
    %v28 = vld [vmem:[%s0 + $0x8] sm:$0xff]
    %v29 = vld [vmem:[%s0 + $0x10] sm:$0xff]
    %v30 = vld [vmem:[%s0 + $0x18] sm:$0xff]
    %v31 = vld [vmem:[%s0 + $0x20] sm:$0xff]
    %v32 = vld [vmem:[%s0 + $0x28] sm:$0xff]
    %v33 = vld [vmem:[%s0 + $0x30] sm:$0xff]
    %v34 = vld [vmem:[%s0 + $0x38] sm:$0xff]
    %v35 = vcvt.s32.f32 %v27
    %v36 = vcvt.s32.f32 %v28
    %v37 = vcvt.s32.f32 %v29
    %v38 = vcvt.s32.f32 %v30
    %v39 = vcvt.s32.f32 %v31
    %v40 = vcvt.s32.f32 %v32
    %v41 = vcvt.s32.f32 %v33
    %v42 = vcvt.s32.f32 %v34
    %v43 = vlaneseq
    %v44 = vand.u32 %v43, 127
    %45 = vset.pattern.permute.xlu0 0
    %46 = vperm.xlu0 %45, %v27
    %v47 = vpop.permute.xlu0 %46
    %48 = vset.pattern.permute.xlu0 0
    %49 = vperm.xlu0 %48, %v28
    %v50 = vpop.permute.xlu0 %49
    %51 = vset.pattern.permute.xlu0 0
    %52 = vperm.xlu0 %51, %v29
    %v53 = vpop.permute.xlu0 %52
    %54 = vset.pattern.permute.xlu0 0
    %55 = vperm.xlu0 %54, %v30
    %v56 = vpop.permute.xlu0 %55
    %57 = vset.pattern.permute.xlu0 0
    %58 = vperm.xlu0 %57, %v31
    %v59 = vpop.permute.xlu0 %58
    %60 = vset.pattern.permute.xlu0 0
    %61 = vperm.xlu0 %60, %v32
    %v62 = vpop.permute.xlu0 %61
    %63 = vset.pattern.permute.xlu0 0
    %64 = vperm.xlu0 %63, %v33
    %v65 = vpop.permute.xlu0 %64
    %66 = vset.pattern.permute.xlu0 0
    %67 = vperm.xlu0 %66, %v34
    %v68 = vpop.permute.xlu0 %67
    %vm69 = vcmp.eq.s32.totalorder %v44, %v47
    %vm70 = vcmp.eq.s32.totalorder %v44, %v50
    %vm71 = vcmp.eq.s32.totalorder %v44, %v53
    %vm72 = vcmp.eq.s32.totalorder %v44, %v56
    %vm73 = vcmp.eq.s32.totalorder %v44, %v59
    %vm74 = vcmp.eq.s32.totalorder %v44, %v62
    %vm75 = vcmp.eq.s32.totalorder %v44, %v65
    %vm76 = vcmp.eq.s32.totalorder %v44, %v68
    %v77 = vsel %vm69, 1, 0
    %v78 = vsel %vm70, 1, 0
    %v79 = vsel %vm71, 1, 0
    %v80 = vsel %vm72, 1, 0
    %v81 = vsel %vm73, 1, 0
    %v82 = vsel %vm74, 1, 0
    %v83 = vsel %vm75, 1, 0
    %v84 = vsel %vm76, 1, 0
    %v85 = vcvt.s32.f32 %v77
    %v86 = vcvt.s32.f32 %v78
    %v87 = vcvt.s32.f32 %v79
    %v88 = vcvt.s32.f32 %v80
    %v89 = vcvt.s32.f32 %v81
    %v90 = vcvt.s32.f32 %v82
    %v91 = vcvt.s32.f32 %v83
    %v92 = vcvt.s32.f32 %v84
    %v93 = vld [vmem:[#allocation3] sm:$0xff]
    %v94 = vld [vmem:[#allocation3 + $0x8] sm:$0xff]
    %v95 = vld [vmem:[#allocation3 + $0x10] sm:$0xff]
    %v96 = vld [vmem:[#allocation3 + $0x18] sm:$0xff]
    %v97 = vld [vmem:[#allocation3 + $0x20] sm:$0xff]
    %v98 = vld [vmem:[#allocation3 + $0x28] sm:$0xff]
    %v99 = vld [vmem:[#allocation3 + $0x30] sm:$0xff]
    %v100 = vld [vmem:[#allocation3 + $0x38] sm:$0xff]
    %vm101 = vcmask 523264
    %v103 = vsel %vm101, %v85, 0
    %v106 = vsel %vm101, %v86, 0
    %v109 = vsel %vm101, %v87, 0
    %v112 = vsel %vm101, %v88, 0
    %v115 = vsel %vm101, %v89, 0
    %v118 = vsel %vm101, %v90, 0
    %v121 = vsel %vm101, %v91, 0
    %v124 = vsel %vm101, %v92, 0
    %126 = vmatpush.msra.mxu0 0.0
    %127 = vmatpush.msra.mxu0 0.0
    %128 = vmatpush.msra.mxu0 0.0
    %129 = vmatpush.msra.mxu0 0.0
    %130 = vmatpush.msra.mxu0 0.0
    %131 = vmatpush.msra.mxu0 0.0
    %132 = vmatpush.msra.mxu0 0.0
    %133 = vmatpush.msra.mxu0 0.0
    %134 = vmatpush.msra.mxu0 %v100
    %135 = vmatpush.msra.mxu0 %v99
    %136 = vmatpush.msra.mxu0 %v98
    %137 = vmatpush.msra.mxu0 %v97
    %138 = vmatpush.msra.mxu0 %v96
    %139 = vmatpush.msra.mxu0 %v95
    %140 = vmatpush.msra.mxu0 %v94
    %141 = vmatpush.msra.mxu0 %v93
    %142 = vmatmul.f32.gmra.mxu0 %v103
    %v143 = vpop.f32.mrf.mxu0
    %v144 = vadd.f32 0.0, %v143
    %145 = vmatmul.f32.gmra.mxu0 %v106
    %v146 = vpop.f32.mrf.mxu0
    %v147 = vadd.f32 0.0, %v146
    %148 = vmatmul.f32.gmra.mxu0 %v109
    %v149 = vpop.f32.mrf.mxu0
    %v150 = vadd.f32 0.0, %v149
    %151 = vmatmul.f32.gmra.mxu0 %v112
    %v152 = vpop.f32.mrf.mxu0
    %v153 = vadd.f32 0.0, %v152
    %154 = vmatmul.f32.gmra.mxu0 %v115
    %v155 = vpop.f32.mrf.mxu0
    %v156 = vadd.f32 0.0, %v155
    %157 = vmatmul.f32.gmra.mxu0 %v118
    %v158 = vpop.f32.mrf.mxu0
    %v159 = vadd.f32 0.0, %v158
    %160 = vmatmul.f32.gmra.mxu0 %v121
    %v161 = vpop.f32.mrf.mxu0
    %v162 = vadd.f32 0.0, %v161
    %163 = vmatmul.f32.gmra.mxu0 %v124
    %v164 = vpop.f32.mrf.mxu0
    %v165 = vadd.f32 0.0, %v164
    %166 = vdwg.mxu0
    %v167 = vld [vmem:[#allocation3 + $0x40] sm:$0xff]
    %v168 = vld [vmem:[#allocation3 + $0x48] sm:$0xff]
    %v169 = vld [vmem:[#allocation3 + $0x50] sm:$0xff]
    %v170 = vld [vmem:[#allocation3 + $0x58] sm:$0xff]
    %v171 = vld [vmem:[#allocation3 + $0x60] sm:$0xf]
    %v172 = vlaneseq
    %v173 = vshrl.u32 %v172, 7
    %vm174 = vcmp.lt.s32.totalorder %v173, 2
    %vm175 = vcmp.lt.s32.totalorder %v44, 16
    %vm176 = vmxor %vm174, %vm175
    %vm177 = vmxor %vm176, 1
    %v178 = vsel %vm177, 1, 0
    %v179 = vcvt.s32.f32 %v178
    %v180 = vmul.f32 %v179, 0.0
    %vm181 = vcmask 261120
    %v183 = vsel %vm181, %v180, 0
    %185 = vmatpush.msra.mxu0 0.0
    %186 = vmatpush.msra.mxu0 0.0
    %187 = vmatpush.msra.mxu0 0.0
    %188 = vmatpush.msra.mxu0 0.0
    %189 = vmatpush.msra.mxu0 0.0
    %190 = vmatpush.msra.mxu0 0.0
    %191 = vmatpush.msra.mxu0 0.0
    %192 = vmatpush.msra.mxu0 0.0
    %193 = vmatpush.msra.mxu0 0.0
    %194 = vmatpush.msra.mxu0 0.0
    %195 = vmatpush.msra.mxu0 0.0
    %196 = vmatpush.msra.mxu0 0.0
    %197 = vmatpush.msra.mxu0 %v170
    %198 = vmatpush.msra.mxu0 %v169
    %199 = vmatpush.msra.mxu0 %v168
    %200 = vmatpush.msra.mxu0 %v167
    %201 = vmatmul.f32.gmra.mxu0 %v183
    %v202 = vpop.f32.mrf.mxu0
    %v203 = vadd.f32 0.0, %v202
    %204 = vdwg.mxu0
    %v205 = vadd.f32 %v144, %v203
    %v206 = vxor.u32 %v205, 2147483648
    %v207 = vmul.f32 %v206, 1.442695
    %v208 = vpow.pop %v207
    %v209 = vadd.f32 %v208, 1.0
    %v210 = vrcp.pop %v209
    %v211 = vmul.f32 %v209, %v210
    %v212 = vsub.f32 1.0, %v211
    %v213 = vmul.f32 %v210, %v212
    %v214 = vadd.f32 %v210, %v213
    %vm215 = vweird.f32 %v209
    %vm216 = vweird.f32 %v210
    %vm217 = vmor %vm215, %vm216
    %v218 = vsel %vm217, %v210, %v214
    %v219 = vand.u32 2147483647, %v209
    %vm220 = vcmp.eq.f32.partialorder %v219, 8.507059e+37
    %v221 = vand.u32 %v209, 2147483648
    %v222 = vor.u32 1.1754944e-38, %v221
    %v223 = vsel %vm220, %v222, %v218
    %v224 = vmul.f32 1.0, %v223
    %226 = vrot.lane.b32.xlu0 %v171, 32
    %v227 = vpop.permute.xlu0 %226
    %v229 = vadd.f32 %v203, %v227
    %231 = vrot.lane.b32.xlu0 %v229, 96
    %v232 = vpop.permute.xlu0 %231
    %v234 = vmul.f32 %v224, %v232
    %236 = vrot.lane.b32.xlu0 %v234, 32
    %v237 = vpop.permute.xlu0 %236
    %v239 = vadd.f32 %v144, %v237
    %v240 = vtanh.pop %v239
    %v241 = vsub.f32 1.0, %v224
    %243 = vrot.lane.b32.xlu0 %v240, 112
    %v244 = vpop.permute.xlu0 %243
    %v246 = vmul.f32 %v241, %v244
    %v247 = vmul.f32 %v224, 0.0
    %v248 = vadd.f32 %v246, %v247
    %250 = vset.pattern.permute.xlu0 1
    %251 = vperm.xlu0 %250, %v35
    %v252 = vpop.permute.xlu0 %251
    %v254 = vmul.f32 %v252, %v248
    %v255 = vsub.f32 1.0, %v35
    %257 = vset.pattern.permute.xlu0 1
    %258 = vperm.xlu0 %257, %v255
    %v259 = vpop.permute.xlu0 %258
    %v261 = vmul.f32 %v259, 0.0
    %v262 = vadd.f32 %v254, %v261
    %v263 = vmul.f32 %v252, %v262
    %265 = vrot.lane.b32.xlu0 %v263, 112
    %v266 = vpop.permute.xlu0 %265
    %vm268 = vcmask 123904
    %269 = vst.msk [vmem:[#allocation2] sm:$0x3] %vm268, %v266
    %vm270 = vcmask 257154
    %271 = vst.msk [vmem:[#allocation2 + $0xc] sm:$0xc] %vm270, %v263
    %273 = vrot.lane.b32.xlu0 %v262, 112
    %v274 = vpop.permute.xlu0 %273
    %vm276 = vcmask 130048
    %v277 = vsel %vm276, %v274, %v262
    %v278 = vmul.f32 %v277, %v179
    %v280 = vsel %vm181, %v278, 0
    %282 = vmatpush.msra.mxu0 0.0
    %283 = vmatpush.msra.mxu0 0.0
    %284 = vmatpush.msra.mxu0 0.0
    %285 = vmatpush.msra.mxu0 0.0
    %286 = vmatpush.msra.mxu0 0.0
    %287 = vmatpush.msra.mxu0 0.0
    %288 = vmatpush.msra.mxu0 0.0
    %289 = vmatpush.msra.mxu0 0.0
    %290 = vmatpush.msra.mxu0 0.0
    %291 = vmatpush.msra.mxu0 0.0
    %292 = vmatpush.msra.mxu0 0.0
    %293 = vmatpush.msra.mxu0 0.0
    %294 = vmatpush.msra.mxu0 %v170
    %295 = vmatpush.msra.mxu0 %v169
    %296 = vmatpush.msra.mxu0 %v168
    %297 = vmatpush.msra.mxu0 %v167
    %298 = vmatmul.f32.gmra.mxu0 %v280
    %v299 = vpop.f32.mrf.mxu0
    %v300 = vadd.f32 0.0, %v299
    %301 = vdwg.mxu0
    %v302 = vadd.f32 %v147, %v300
    %v303 = vxor.u32 %v302, 2147483648
    %v304 = vmul.f32 %v303, 1.442695
    %v305 = vpow.pop %v304
    %v306 = vadd.f32 %v305, 1.0
    %v307 = vrcp.pop %v306
    %v308 = vmul.f32 %v306, %v307
    %v309 = vsub.f32 1.0, %v308
    %v310 = vmul.f32 %v307, %v309
    %v311 = vadd.f32 %v307, %v310
    %vm312 = vweird.f32 %v306
    %vm313 = vweird.f32 %v307
    %vm314 = vmor %vm312, %vm313
    %v315 = vsel %vm314, %v307, %v311
    %v316 = vand.u32 2147483647, %v306
    %vm317 = vcmp.eq.f32.partialorder %v316, 8.507059e+37
    %v318 = vand.u32 %v306, 2147483648
    %v319 = vor.u32 1.1754944e-38, %v318
    %v320 = vsel %vm317, %v319, %v315
    %v321 = vmul.f32 1.0, %v320
    %v322 = vadd.f32 %v300, %v227
    %324 = vrot.lane.b32.xlu0 %v322, 96
    %v325 = vpop.permute.xlu0 %324
    %v327 = vmul.f32 %v321, %v325
    %329 = vrot.lane.b32.xlu0 %v327, 32
    %v330 = vpop.permute.xlu0 %329
    %v332 = vadd.f32 %v147, %v330
    %v333 = vtanh.pop %v332
    %v334 = vsub.f32 1.0, %v321
    %336 = vrot.lane.b32.xlu0 %v333, 112
    %v337 = vpop.permute.xlu0 %336
    %v339 = vmul.f32 %v334, %v337
    %v340 = vmul.f32 %v321, %v262
    %v341 = vadd.f32 %v339, %v340
    %343 = vset.pattern.permute.xlu0 1
    %344 = vperm.xlu0 %343, %v36
    %v345 = vpop.permute.xlu0 %344
    %v347 = vmul.f32 %v345, %v341
    %v348 = vsub.f32 1.0, %v36
    %350 = vset.pattern.permute.xlu0 1
    %351 = vperm.xlu0 %350, %v348
    %v352 = vpop.permute.xlu0 %351
    %v354 = vmul.f32 %v352, %v262
    %v355 = vadd.f32 %v347, %v354
    %v356 = vmul.f32 %v345, %v355
    %358 = vrot.lane.b32.xlu0 %v356, 112
    %v359 = vpop.permute.xlu0 %358
    %361 = vst.msk [vmem:[#allocation2 + $0x2] sm:$0x3] %vm268, %v359
    %362 = vst.msk [vmem:[#allocation2 + $0xa] sm:$0xc] %vm270, %v356
    %364 = vrot.lane.b32.xlu0 %v355, 112
    %v365 = vpop.permute.xlu0 %364
    %v367 = vsel %vm276, %v365, %v355
    %v368 = vmul.f32 %v367, %v179
    %v370 = vsel %vm181, %v368, 0
    %372 = vmatpush.msra.mxu0 0.0
    %373 = vmatpush.msra.mxu0 0.0
    %374 = vmatpush.msra.mxu0 0.0
    %375 = vmatpush.msra.mxu0 0.0
    %376 = vmatpush.msra.mxu0 0.0
    %377 = vmatpush.msra.mxu0 0.0
    %378 = vmatpush.msra.mxu0 0.0
    %379 = vmatpush.msra.mxu0 0.0
    %380 = vmatpush.msra.mxu0 0.0
    %381 = vmatpush.msra.mxu0 0.0
    %382 = vmatpush.msra.mxu0 0.0
    %383 = vmatpush.msra.mxu0 0.0
    %384 = vmatpush.msra.mxu0 %v170
    %385 = vmatpush.msra.mxu0 %v169
    %386 = vmatpush.msra.mxu0 %v168
    %387 = vmatpush.msra.mxu0 %v167
    %388 = vmatmul.f32.gmra.mxu0 %v370
    %v389 = vpop.f32.mrf.mxu0
    %v390 = vadd.f32 0.0, %v389
    %391 = vdwg.mxu0
    %v392 = vadd.f32 %v150, %v390
    %v393 = vxor.u32 %v392, 2147483648
    %v394 = vmul.f32 %v393, 1.442695
    %v395 = vpow.pop %v394
    %v396 = vadd.f32 %v395, 1.0
    %v397 = vrcp.pop %v396
    %v398 = vmul.f32 %v396, %v397
    %v399 = vsub.f32 1.0, %v398
    %v400 = vmul.f32 %v397, %v399
    %v401 = vadd.f32 %v397, %v400
    %vm402 = vweird.f32 %v396
    %vm403 = vweird.f32 %v397
    %vm404 = vmor %vm402, %vm403
    %v405 = vsel %vm404, %v397, %v401
    %v406 = vand.u32 2147483647, %v396
    %vm407 = vcmp.eq.f32.partialorder %v406, 8.507059e+37
    %v408 = vand.u32 %v396, 2147483648
    %v409 = vor.u32 1.1754944e-38, %v408
    %v410 = vsel %vm407, %v409, %v405
    %v411 = vmul.f32 1.0, %v410
    %v412 = vadd.f32 %v390, %v227
    %414 = vrot.lane.b32.xlu0 %v412, 96
    %v415 = vpop.permute.xlu0 %414
    %v417 = vmul.f32 %v411, %v415
    %419 = vrot.lane.b32.xlu0 %v417, 32
    %v420 = vpop.permute.xlu0 %419
    %v422 = vadd.f32 %v150, %v420
    %v423 = vtanh.pop %v422
    %v424 = vsub.f32 1.0, %v411
    %426 = vrot.lane.b32.xlu0 %v423, 112
    %v427 = vpop.permute.xlu0 %426
    %v429 = vmul.f32 %v424, %v427
    %v430 = vmul.f32 %v411, %v355
    %v431 = vadd.f32 %v429, %v430
    %433 = vset.pattern.permute.xlu0 1
    %434 = vperm.xlu0 %433, %v37
    %v435 = vpop.permute.xlu0 %434
    %v437 = vmul.f32 %v435, %v431
    %v438 = vsub.f32 1.0, %v37
    %440 = vset.pattern.permute.xlu0 1
    %441 = vperm.xlu0 %440, %v438
    %v442 = vpop.permute.xlu0 %441
    %v444 = vmul.f32 %v442, %v355
    %v445 = vadd.f32 %v437, %v444
    %v446 = vmul.f32 %v435, %v445
    %448 = vrot.lane.b32.xlu0 %v446, 112
    %v449 = vpop.permute.xlu0 %448
    %451 = vst.msk [vmem:[#allocation2 + $0x4] sm:$0x3] %vm268, %v449
    %452 = vst.msk [vmem:[#allocation2 + $0x8] sm:$0xc] %vm270, %v446
    %454 = vrot.lane.b32.xlu0 %v445, 112
    %v455 = vpop.permute.xlu0 %454
    %v457 = vsel %vm276, %v455, %v445
    %v458 = vmul.f32 %v457, %v179
    %v460 = vsel %vm181, %v458, 0
    %462 = vmatpush.msra.mxu0 0.0
    %463 = vmatpush.msra.mxu0 0.0
    %464 = vmatpush.msra.mxu0 0.0
    %465 = vmatpush.msra.mxu0 0.0
    %466 = vmatpush.msra.mxu0 0.0
    %467 = vmatpush.msra.mxu0 0.0
    %468 = vmatpush.msra.mxu0 0.0
    %469 = vmatpush.msra.mxu0 0.0
    %470 = vmatpush.msra.mxu0 0.0
    %471 = vmatpush.msra.mxu0 0.0
    %472 = vmatpush.msra.mxu0 0.0
    %473 = vmatpush.msra.mxu0 0.0
    %474 = vmatpush.msra.mxu0 %v170
    %475 = vmatpush.msra.mxu0 %v169
    %476 = vmatpush.msra.mxu0 %v168
    %477 = vmatpush.msra.mxu0 %v167
    %478 = vmatmul.f32.gmra.mxu0 %v460
    %v479 = vpop.f32.mrf.mxu0
    %v480 = vadd.f32 0.0, %v479
    %481 = vdwg.mxu0
    %v482 = vadd.f32 %v153, %v480
    %v483 = vxor.u32 %v482, 2147483648
    %v484 = vmul.f32 %v483, 1.442695
    %v485 = vpow.pop %v484
    %v486 = vadd.f32 %v485, 1.0
    %v487 = vrcp.pop %v486
    %v488 = vmul.f32 %v486, %v487
    %v489 = vsub.f32 1.0, %v488
    %v490 = vmul.f32 %v487, %v489
    %v491 = vadd.f32 %v487, %v490
    %vm492 = vweird.f32 %v486
    %vm493 = vweird.f32 %v487
    %vm494 = vmor %vm492, %vm493
    %v495 = vsel %vm494, %v487, %v491
    %v496 = vand.u32 2147483647, %v486
    %vm497 = vcmp.eq.f32.partialorder %v496, 8.507059e+37
    %v498 = vand.u32 %v486, 2147483648
    %v499 = vor.u32 1.1754944e-38, %v498
    %v500 = vsel %vm497, %v499, %v495
    %v501 = vmul.f32 1.0, %v500
    %v502 = vadd.f32 %v480, %v227
    %504 = vrot.lane.b32.xlu0 %v502, 96
    %v505 = vpop.permute.xlu0 %504
    %v507 = vmul.f32 %v501, %v505
    %509 = vrot.lane.b32.xlu0 %v507, 32
    %v510 = vpop.permute.xlu0 %509
    %v512 = vadd.f32 %v153, %v510
    %v513 = vtanh.pop %v512
    %v514 = vsub.f32 1.0, %v501
    %516 = vrot.lane.b32.xlu0 %v513, 112
    %v517 = vpop.permute.xlu0 %516
    %v519 = vmul.f32 %v514, %v517
    %v520 = vmul.f32 %v501, %v445
    %v521 = vadd.f32 %v519, %v520
    %523 = vset.pattern.permute.xlu0 1
    %524 = vperm.xlu0 %523, %v38
    %v525 = vpop.permute.xlu0 %524
    %v527 = vmul.f32 %v525, %v521
    %v528 = vsub.f32 1.0, %v38
    %530 = vset.pattern.permute.xlu0 1
    %531 = vperm.xlu0 %530, %v528
    %v532 = vpop.permute.xlu0 %531
    %v534 = vmul.f32 %v532, %v445
    %v535 = vadd.f32 %v527, %v534
    %v536 = vmul.f32 %v525, %v535
    %538 = vrot.lane.b32.xlu0 %v536, 112
    %v539 = vpop.permute.xlu0 %538
    %541 = vst.msk [vmem:[#allocation2 + $0x6] sm:$0x3] %vm268, %v539
    %542 = vst.msk [vmem:[#allocation2 + $0x6] sm:$0xc] %vm270, %v536
    %544 = vrot.lane.b32.xlu0 %v535, 112
    %v545 = vpop.permute.xlu0 %544
    %v547 = vsel %vm276, %v545, %v535
    %v548 = vmul.f32 %v547, %v179
    %v550 = vsel %vm181, %v548, 0
    %552 = vmatpush.msra.mxu0 0.0
    %553 = vmatpush.msra.mxu0 0.0
    %554 = vmatpush.msra.mxu0 0.0
    %555 = vmatpush.msra.mxu0 0.0
    %556 = vmatpush.msra.mxu0 0.0
    %557 = vmatpush.msra.mxu0 0.0
    %558 = vmatpush.msra.mxu0 0.0
    %559 = vmatpush.msra.mxu0 0.0
    %560 = vmatpush.msra.mxu0 0.0
    %561 = vmatpush.msra.mxu0 0.0
    %562 = vmatpush.msra.mxu0 0.0
    %563 = vmatpush.msra.mxu0 0.0
    %564 = vmatpush.msra.mxu0 %v170
    %565 = vmatpush.msra.mxu0 %v169
    %566 = vmatpush.msra.mxu0 %v168
    %567 = vmatpush.msra.mxu0 %v167
    %568 = vmatmul.f32.gmra.mxu0 %v550
    %v569 = vpop.f32.mrf.mxu0
    %v570 = vadd.f32 0.0, %v569
    %571 = vdwg.mxu0
    %v572 = vadd.f32 %v156, %v570
    %v573 = vxor.u32 %v572, 2147483648
    %v574 = vmul.f32 %v573, 1.442695
    %v575 = vpow.pop %v574
    %v576 = vadd.f32 %v575, 1.0
    %v577 = vrcp.pop %v576
    %v578 = vmul.f32 %v576, %v577
    %v579 = vsub.f32 1.0, %v578
    %v580 = vmul.f32 %v577, %v579
    %v581 = vadd.f32 %v577, %v580
    %vm582 = vweird.f32 %v576
    %vm583 = vweird.f32 %v577
    %vm584 = vmor %vm582, %vm583
    %v585 = vsel %vm584, %v577, %v581
    %v586 = vand.u32 2147483647, %v576
    %vm587 = vcmp.eq.f32.partialorder %v586, 8.507059e+37
    %v588 = vand.u32 %v576, 2147483648
    %v589 = vor.u32 1.1754944e-38, %v588
    %v590 = vsel %vm587, %v589, %v585
    %v591 = vmul.f32 1.0, %v590
    %v592 = vadd.f32 %v570, %v227
    %594 = vrot.lane.b32.xlu0 %v592, 96
    %v595 = vpop.permute.xlu0 %594
    %v597 = vmul.f32 %v591, %v595
    %599 = vrot.lane.b32.xlu0 %v597, 32
    %v600 = vpop.permute.xlu0 %599
    %v602 = vadd.f32 %v156, %v600
    %v603 = vtanh.pop %v602
    %v604 = vsub.f32 1.0, %v591
    %606 = vrot.lane.b32.xlu0 %v603, 112
    %v607 = vpop.permute.xlu0 %606
    %v609 = vmul.f32 %v604, %v607
    %v610 = vmul.f32 %v591, %v535
    %v611 = vadd.f32 %v609, %v610
    %613 = vset.pattern.permute.xlu0 1
    %614 = vperm.xlu0 %613, %v39
    %v615 = vpop.permute.xlu0 %614
    %v617 = vmul.f32 %v615, %v611
    %v618 = vsub.f32 1.0, %v39
    %620 = vset.pattern.permute.xlu0 1
    %621 = vperm.xlu0 %620, %v618
    %v622 = vpop.permute.xlu0 %621
    %v624 = vmul.f32 %v622, %v535
    %v625 = vadd.f32 %v617, %v624
    %v626 = vmul.f32 %v615, %v625
    %628 = vrot.lane.b32.xlu0 %v626, 112
    %v629 = vpop.permute.xlu0 %628
    %631 = vst.msk [vmem:[#allocation2 + $0x8] sm:$0x3] %vm268, %v629
    %632 = vst.msk [vmem:[#allocation2 + $0x4] sm:$0xc] %vm270, %v626
    %634 = vrot.lane.b32.xlu0 %v625, 112
    %v635 = vpop.permute.xlu0 %634
    %v637 = vsel %vm276, %v635, %v625
    %v638 = vmul.f32 %v637, %v179
    %v640 = vsel %vm181, %v638, 0
    %642 = vmatpush.msra.mxu0 0.0
    %643 = vmatpush.msra.mxu0 0.0
    %644 = vmatpush.msra.mxu0 0.0
    %645 = vmatpush.msra.mxu0 0.0
    %646 = vmatpush.msra.mxu0 0.0
    %647 = vmatpush.msra.mxu0 0.0
    %648 = vmatpush.msra.mxu0 0.0
    %649 = vmatpush.msra.mxu0 0.0
    %650 = vmatpush.msra.mxu0 0.0
    %651 = vmatpush.msra.mxu0 0.0
    %652 = vmatpush.msra.mxu0 0.0
    %653 = vmatpush.msra.mxu0 0.0
    %654 = vmatpush.msra.mxu0 %v170
    %655 = vmatpush.msra.mxu0 %v169
    %656 = vmatpush.msra.mxu0 %v168
    %657 = vmatpush.msra.mxu0 %v167
    %658 = vmatmul.f32.gmra.mxu0 %v640
    %v659 = vpop.f32.mrf.mxu0
    %v660 = vadd.f32 0.0, %v659
    %661 = vdwg.mxu0
    %v662 = vadd.f32 %v159, %v660
    %v663 = vxor.u32 %v662, 2147483648
    %v664 = vmul.f32 %v663, 1.442695
    %v665 = vpow.pop %v664
    %v666 = vadd.f32 %v665, 1.0
    %v667 = vrcp.pop %v666
    %v668 = vmul.f32 %v666, %v667
    %v669 = vsub.f32 1.0, %v668
    %v670 = vmul.f32 %v667, %v669
    %v671 = vadd.f32 %v667, %v670
    %vm672 = vweird.f32 %v666
    %vm673 = vweird.f32 %v667
    %vm674 = vmor %vm672, %vm673
    %v675 = vsel %vm674, %v667, %v671
    %v676 = vand.u32 2147483647, %v666
    %vm677 = vcmp.eq.f32.partialorder %v676, 8.507059e+37
    %v678 = vand.u32 %v666, 2147483648
    %v679 = vor.u32 1.1754944e-38, %v678
    %v680 = vsel %vm677, %v679, %v675
    %v681 = vmul.f32 1.0, %v680
    %v682 = vadd.f32 %v660, %v227
    %684 = vrot.lane.b32.xlu0 %v682, 96
    %v685 = vpop.permute.xlu0 %684
    %v687 = vmul.f32 %v681, %v685
    %689 = vrot.lane.b32.xlu0 %v687, 32
    %v690 = vpop.permute.xlu0 %689
    %v692 = vadd.f32 %v159, %v690
    %v693 = vtanh.pop %v692
    %v694 = vsub.f32 1.0, %v681
    %696 = vrot.lane.b32.xlu0 %v693, 112
    %v697 = vpop.permute.xlu0 %696
    %v699 = vmul.f32 %v694, %v697
    %v700 = vmul.f32 %v681, %v625
    %v701 = vadd.f32 %v699, %v700
    %703 = vset.pattern.permute.xlu0 1
    %704 = vperm.xlu0 %703, %v40
    %v705 = vpop.permute.xlu0 %704
    %v707 = vmul.f32 %v705, %v701
    %v708 = vsub.f32 1.0, %v40
    %710 = vset.pattern.permute.xlu0 1
    %711 = vperm.xlu0 %710, %v708
    %v712 = vpop.permute.xlu0 %711
    %v714 = vmul.f32 %v712, %v625
    %v715 = vadd.f32 %v707, %v714
    %v716 = vmul.f32 %v705, %v715
    %718 = vrot.lane.b32.xlu0 %v716, 112
    %v719 = vpop.permute.xlu0 %718
    %721 = vst.msk [vmem:[#allocation2 + $0xa] sm:$0x3] %vm268, %v719
    %722 = vst.msk [vmem:[#allocation2 + $0x2] sm:$0xc] %vm270, %v716
    %724 = vrot.lane.b32.xlu0 %v715, 112
    %v725 = vpop.permute.xlu0 %724
    %v727 = vsel %vm276, %v725, %v715
    %v728 = vmul.f32 %v727, %v179
    %v730 = vsel %vm181, %v728, 0
    %732 = vmatpush.msra.mxu0 0.0
    %733 = vmatpush.msra.mxu0 0.0
    %734 = vmatpush.msra.mxu0 0.0
    %735 = vmatpush.msra.mxu0 0.0
    %736 = vmatpush.msra.mxu0 0.0
    %737 = vmatpush.msra.mxu0 0.0
    %738 = vmatpush.msra.mxu0 0.0
    %739 = vmatpush.msra.mxu0 0.0
    %740 = vmatpush.msra.mxu0 0.0
    %741 = vmatpush.msra.mxu0 0.0
    %742 = vmatpush.msra.mxu0 0.0
    %743 = vmatpush.msra.mxu0 0.0
    %744 = vmatpush.msra.mxu0 %v170
    %745 = vmatpush.msra.mxu0 %v169
    %746 = vmatpush.msra.mxu0 %v168
    %747 = vmatpush.msra.mxu0 %v167
    %748 = vmatmul.f32.gmra.mxu0 %v730
    %v749 = vpop.f32.mrf.mxu0
    %v750 = vadd.f32 0.0, %v749
    %751 = vdwg.mxu0
    %v752 = vadd.f32 %v162, %v750
    %v753 = vxor.u32 %v752, 2147483648
    %v754 = vmul.f32 %v753, 1.442695
    %v755 = vpow.pop %v754
    %v756 = vadd.f32 %v755, 1.0
    %v757 = vrcp.pop %v756
    %v758 = vmul.f32 %v756, %v757
    %v759 = vsub.f32 1.0, %v758
    %v760 = vmul.f32 %v757, %v759
    %v761 = vadd.f32 %v757, %v760
    %vm762 = vweird.f32 %v756
    %vm763 = vweird.f32 %v757
    %vm764 = vmor %vm762, %vm763
    %v765 = vsel %vm764, %v757, %v761
    %v766 = vand.u32 2147483647, %v756
    %vm767 = vcmp.eq.f32.partialorder %v766, 8.507059e+37
    %v768 = vand.u32 %v756, 2147483648
    %v769 = vor.u32 1.1754944e-38, %v768
    %v770 = vsel %vm767, %v769, %v765
    %v771 = vmul.f32 1.0, %v770
    %v772 = vadd.f32 %v750, %v227
    %774 = vrot.lane.b32.xlu0 %v772, 96
    %v775 = vpop.permute.xlu0 %774
    %v777 = vmul.f32 %v771, %v775
    %779 = vrot.lane.b32.xlu0 %v777, 32
    %v780 = vpop.permute.xlu0 %779
    %v782 = vadd.f32 %v162, %v780
    %v783 = vtanh.pop %v782
    %v784 = vsub.f32 1.0, %v771
    %786 = vrot.lane.b32.xlu0 %v783, 112
    %v787 = vpop.permute.xlu0 %786
    %v789 = vmul.f32 %v784, %v787
    %v790 = vmul.f32 %v771, %v715
    %v791 = vadd.f32 %v789, %v790
    %793 = vset.pattern.permute.xlu0 1
    %794 = vperm.xlu0 %793, %v41
    %v795 = vpop.permute.xlu0 %794
    %v797 = vmul.f32 %v795, %v791
    %v798 = vsub.f32 1.0, %v41
    %800 = vset.pattern.permute.xlu0 1
    %801 = vperm.xlu0 %800, %v798
    %v802 = vpop.permute.xlu0 %801
    %v804 = vmul.f32 %v802, %v715
    %v805 = vadd.f32 %v797, %v804
    %v806 = vmul.f32 %v795, %v805
    %808 = vrot.lane.b32.xlu0 %v806, 112
    %v809 = vpop.permute.xlu0 %808
    %811 = vst.msk [vmem:[#allocation2 + $0xc] sm:$0x3] %vm268, %v809
    %812 = vst.msk [vmem:[#allocation2] sm:$0xc] %vm270, %v806
    %814 = vrot.lane.b32.xlu0 %v805, 112
    %v815 = vpop.permute.xlu0 %814
    %v817 = vsel %vm276, %v815, %v805
    %v818 = vmul.f32 %v817, %v179
    %v820 = vsel %vm181, %v818, 0
    %822 = vmatpush.msra.mxu0 0.0
    %823 = vmatpush.msra.mxu0 0.0
    %824 = vmatpush.msra.mxu0 0.0
    %825 = vmatpush.msra.mxu0 0.0
    %826 = vmatpush.msra.mxu0 0.0
    %827 = vmatpush.msra.mxu0 0.0
    %828 = vmatpush.msra.mxu0 0.0
    %829 = vmatpush.msra.mxu0 0.0
    %830 = vmatpush.msra.mxu0 0.0
    %831 = vmatpush.msra.mxu0 0.0
    %832 = vmatpush.msra.mxu0 0.0
    %833 = vmatpush.msra.mxu0 0.0
    %834 = vmatpush.msra.mxu0 %v170
    %835 = vmatpush.msra.mxu0 %v169
    %836 = vmatpush.msra.mxu0 %v168
    %837 = vmatpush.msra.mxu0 %v167
    %838 = vmatmul.f32.gmra.mxu0 %v820
    %v839 = vpop.f32.mrf.mxu0
    %v840 = vadd.f32 0.0, %v839
    %841 = vdwg.mxu0
    %v842 = vadd.f32 %v165, %v840
    %v843 = vxor.u32 %v842, 2147483648
    %v844 = vmul.f32 %v843, 1.442695
    %v845 = vpow.pop %v844
    %v846 = vadd.f32 %v845, 1.0
    %v847 = vrcp.pop %v846
    %v848 = vmul.f32 %v846, %v847
    %v849 = vsub.f32 1.0, %v848
    %v850 = vmul.f32 %v847, %v849
    %v851 = vadd.f32 %v847, %v850
    %vm852 = vweird.f32 %v846
    %vm853 = vweird.f32 %v847
    %vm854 = vmor %vm852, %vm853
    %v855 = vsel %vm854, %v847, %v851
    %v856 = vand.u32 2147483647, %v846
    %vm857 = vcmp.eq.f32.partialorder %v856, 8.507059e+37
    %v858 = vand.u32 %v846, 2147483648
    %v859 = vor.u32 1.1754944e-38, %v858
    %v860 = vsel %vm857, %v859, %v855
    %v861 = vmul.f32 1.0, %v860
    %v862 = vadd.f32 %v840, %v227
    %864 = vrot.lane.b32.xlu0 %v862, 96
    %v865 = vpop.permute.xlu0 %864
    %v867 = vmul.f32 %v861, %v865
    %869 = vrot.lane.b32.xlu0 %v867, 32
    %v870 = vpop.permute.xlu0 %869
    %v872 = vadd.f32 %v165, %v870
    %v873 = vtanh.pop %v872
    %v874 = vsub.f32 1.0, %v861
    %876 = vrot.lane.b32.xlu0 %v873, 112
    %v877 = vpop.permute.xlu0 %876
    %v879 = vmul.f32 %v874, %v877
    %v880 = vmul.f32 %v861, %v805
    %v881 = vadd.f32 %v879, %v880
    %883 = vset.pattern.permute.xlu0 1
    %884 = vperm.xlu0 %883, %v42
    %v885 = vpop.permute.xlu0 %884
    %v887 = vmul.f32 %v885, %v881
    %v888 = vsub.f32 1.0, %v42
    %890 = vset.pattern.permute.xlu0 1
    %891 = vperm.xlu0 %890, %v888
    %v892 = vpop.permute.xlu0 %891
    %v894 = vmul.f32 %v892, %v805
    %v895 = vadd.f32 %v887, %v894
    %v896 = vmul.f32 %v885, %v895
    %898 = vrot.lane.b32.xlu0 %v896, 112
    %v899 = vpop.permute.xlu0 %898
    %901 = vst.msk [vmem:[#allocation2 + $0xe] sm:$0x3] %vm268, %v899
    %902 = vst.msk [vmem:[#allocation2 - $0x2] sm:$0xc] %vm270, %v896
    %v903 = vld [vmem:[#allocation2] sm:$0xff]
    %v904 = vld [vmem:[#allocation2 + $0x8] sm:$0xff]
    %v905 = vld [vmem:[#allocation3 + $0x68] sm:$0xff]
    %v906 = vld [vmem:[#allocation3 + $0x70] sm:$0xff]
    %v907 = vld [vmem:[#allocation3 + $0x78] sm:$0xff]
    %v908 = vld [vmem:[#allocation3 + $0x80] sm:$0xff]
    %v909 = vld [vmem:[#allocation3 + $0x88] sm:$0x1]
    %v910 = vld [vmem:[#allocation3 + $0x90] sm:$0xff]
    %v911 = vld [vmem:[#allocation3 + $0x98] sm:$0x1]
    %v912 = vperm.slane %v909, 0
    %v914 = vsel %vm181, %v903, 0
    %v917 = vsel %vm181, %v904, 0
    %919 = vmatpush.msra.mxu0 0.0
    %920 = vmatpush.msra.mxu0 0.0
    %921 = vmatpush.msra.mxu0 0.0
    %922 = vmatpush.msra.mxu0 0.0
    %923 = vmatpush.msra.mxu0 0.0
    %924 = vmatpush.msra.mxu0 0.0
    %925 = vmatpush.msra.mxu0 0.0
    %926 = vmatpush.msra.mxu0 0.0
    %927 = vmatpush.msra.mxu0 0.0
    %928 = vmatpush.msra.mxu0 0.0
    %929 = vmatpush.msra.mxu0 0.0
    %930 = vmatpush.msra.mxu0 0.0
    %931 = vmatpush.msra.mxu0 %v908
    %932 = vmatpush.msra.mxu0 %v907
    %933 = vmatpush.msra.mxu0 %v906
    %934 = vmatpush.msra.mxu0 %v905
    %935 = vmatmul.f32.gmra.mxu0 %v914
    %v936 = vpop.f32.mrf.mxu0
    %v937 = vadd.f32 %v912, %v936
    %938 = vmatmul.f32.gmra.mxu0 %v917
    %v939 = vpop.f32.mrf.mxu0
    %v940 = vadd.f32 %v912, %v939
    %941 = vdwg.mxu0
    %v942 = vmax.f32 %v937, 0.0
    %v943 = vmax.f32 %v940, 0.0
    %v944 = vperm.slane %v911, 0
    %vm945 = vcmask 64512
    %v947 = vsel %vm945, %v942, 0
    %v950 = vsel %vm945, %v943, 0
    %952 = vmatpush.msra.mxu0 0.0
    %953 = vmatpush.msra.mxu0 0.0
    %954 = vmatpush.msra.mxu0 0.0
    %955 = vmatpush.msra.mxu0 0.0
    %956 = vmatpush.msra.mxu0 0.0
    %957 = vmatpush.msra.mxu0 0.0
    %958 = vmatpush.msra.mxu0 0.0
    %959 = vmatpush.msra.mxu0 0.0
    %960 = vmatpush.msra.mxu0 0.0
    %961 = vmatpush.msra.mxu0 0.0
    %962 = vmatpush.msra.mxu0 0.0
    %963 = vmatpush.msra.mxu0 0.0
    %964 = vmatpush.msra.mxu0 0.0
    %965 = vmatpush.msra.mxu0 0.0
    %966 = vmatpush.msra.mxu0 0.0
    %967 = vmatpush.msra.mxu0 %v910
    %968 = vmatmul.f32.gmra.mxu0 %v947
    %v969 = vpop.f32.mrf.mxu0
    %v970 = vadd.f32 %v944, %v969
    %971 = vmatmul.f32.gmra.mxu0 %v950
    %v972 = vpop.f32.mrf.mxu0
    %v973 = vadd.f32 %v944, %v972
    %974 = vdwg.mxu0
    %975 = vst [vmem:[%s2] sm:$0xff] %v970
    %976 = vst [vmem:[%s2 + $0x8] sm:$0xff] %v973
    // Predicated region
    $region14: #{interstitial_forward.1} parent=1 // pred_check
      _
    $region15: #{interstitial_forward.1} parent=1 // pred_check_branch
      %978 = sbr.rel (0) target = $region17
    $region16: #{interstitial_forward.1} parent=1 // pred_region
      _
    $region17: #{interstitial_forward.1} parent=1 // pred_fallthru
      _
    // Predicated region
    $region18: #{interstitial_forward.1} parent=1 // pred_check
      _
    $region19: #{interstitial_forward.1} parent=1 // pred_check_branch
      %980 = sbr.rel (0) target = $region21
    $region20: #{interstitial_forward.1} parent=1 // pred_region
      _
    $region21: #{interstitial_forward.1} parent=1 // pred_fallthru
      _
    %981 = vsyncpa [#allocation4], 1

</llo_original>
